<compile_context>
chip_gen: v7x
topology: tpu7x:2x2x1
jax: 0.10.0
libtpu: 0.0.40
codegen_flags: <defaults>
</compile_context>

<pallas_src>
import jax
import jax.numpy as jnp
from jax.experimental import pallas as pl
from jax.experimental.pallas import tpu as pltpu


def srgnn_cell_kernel(
    a_in_ref,        # (TN, N)   bf16  row tile of mean-agg matrix (original edges)
    a_out_ref,       # (TN, N)   bf16  row tile of mean-agg matrix (flipped edges)
    hidden_all_ref,  # (N, D)    bf16  full hidden, VMEM-resident across the grid
    w_cat_ref,       # (2D, 3D)  bf16  [W_in@W_ih1 ; W_out@W_ih2]
    w_hh_ref,        # (D, 3D)   bf16  lin_hh weight
    b_in_ih_ref,     # (1, 3D)   f32   b_in  @ W_ih1
    b_out_ih_ref,    # (1, 3D)   f32   b_out @ W_ih2
    b_gi_ref,        # (1, 3D)   f32   b_ih with r/i columns pre-summed with b_hh
    b_hn_ref,        # (1, D)    f32   n-gate part of b_hh (scaled by reset gate)
    hy_ref,          # (TN, D)   f32   output rows
):
    f32 = jnp.float32
    bf16 = jnp.bfloat16
    TN, D = hy_ref.shape

    a_in = a_in_ref[...]
    a_out = a_out_ref[...]

    # --- quadratic aggregation matmuls: (TN, N) x (N, D), bf16 MXU, f32 acc ---
    agg_in = jnp.dot(a_in, hidden_all_ref[...], preferred_element_type=f32)
    agg_out = jnp.dot(a_out, hidden_all_ref[...], preferred_element_type=f32)

    # --- in-kernel rowsum(A) (0 for zero-in-degree nodes, ~1 otherwise), f32 acc.
    #     Goes to the XLU slot; carries the folded SRGNNConv bias correctly.
    rs_in = jnp.sum(a_in.astype(f32), axis=-1, keepdims=True)
    rs_out = jnp.sum(a_out.astype(f32), axis=-1, keepdims=True)

    # --- gi = lin_ih(cat([input_in, input_out])) with the conv linears folded in,
    #     fused into a single K=2D matmul against W_cat.
    agg = jnp.concatenate([agg_in, agg_out], axis=-1).astype(bf16)   # (TN, 2D)
    gi = (jnp.dot(agg, w_cat_ref[...], preferred_element_type=f32)
          + rs_in * b_in_ih_ref[...]
          + rs_out * b_out_ih_ref[...]
          + b_gi_ref[...])

    # --- gh = lin_hh(hidden); hidden rows sliced from the resident bf16 copy ---
    row0 = pl.multiple_of(pl.program_id(0) * TN, TN)
    hidden_b = hidden_all_ref[pl.ds(row0, TN), :]                    # (TN, D) bf16
    gh = jnp.dot(hidden_b, w_hh_ref[...], preferred_element_type=f32)
    hidden = hidden_b.astype(f32)

    # Lane-aligned gate slabs (D is a multiple of 128).
    i_r = gi[:, 0 * D:1 * D]
    i_i = gi[:, 1 * D:2 * D]
    i_n = gi[:, 2 * D:3 * D]
    h_r = gh[:, 0 * D:1 * D]
    h_i = gh[:, 1 * D:2 * D]
    h_n = gh[:, 2 * D:3 * D] + b_hn_ref[...]

    reset_gate = jax.nn.sigmoid(i_r + h_r)
    input_gate = jax.nn.sigmoid(i_i + h_i)
    new_gate = jnp.tanh(i_n + reset_gate * h_n)
    hy = (1.0 - input_gate) * hidden + input_gate * new_gate

    hy_ref[...] = hy.astype(hy_ref.dtype)


def prepare_params(params, dim):
    """One-time (per model) folding of the SRGNNConv linears into lin_ih + bf16 casts."""
    D = dim
    f32, bf16 = jnp.float32, jnp.bfloat16
    w_ih1, w_ih2 = params["w_ih1"], params["w_ih2"]
    w_in_ih = params["w_in"] @ w_ih1      # (D, 3D)
    w_out_ih = params["w_out"] @ w_ih2    # (D, 3D)
    w_cat = jnp.concatenate([w_in_ih, w_out_ih], axis=0).astype(bf16)   # (2D, 3D)
    b_in_ih = (params["b_in"] @ w_ih1).astype(f32)    # (1, 3D)
    b_out_ih = (params["b_out"] @ w_ih2).astype(f32)  # (1, 3D)
    b_ih, b_hh = params["b_ih"], params["b_hh"]
    # Pre-sum r/i-gate biases of lin_ih and lin_hh; keep b_hh's n-part separate
    # (it is scaled by the reset gate).
    b_gi = jnp.concatenate(
        [b_ih[:, :2 * D] + b_hh[:, :2 * D], b_ih[:, 2 * D:]], axis=1).astype(f32)
    b_hn = b_hh[:, 2 * D:].astype(f32)
    return {
        "w_cat": w_cat,
        "w_hh": params["w_hh"].astype(bf16),
        "b_in_ih": b_in_ih,
        "b_out_ih": b_out_ih,
        "b_gi": b_gi,
        "b_hn": b_hn,
    }


def srgnn_cell(hidden, a_in, a_out, prep, *, tile_rows=128):
    """SRGNNCell forward: row-tiled Pallas kernel over the dense aggregation matrices.

    `a_in` / `a_out` must already be in the streaming dtype (bf16), built once at
    graph-construction time by build_mean_agg_matrix.
    """
    N, D = hidden.shape
    TN = tile_rows
    assert N % TN == 0 and TN % 16 == 0, "row tile must divide N and be a multiple of 16"
    assert D % 128 == 0, "feature dim must be lane-aligned (multiple of 128)"
    assert a_in.dtype == jnp.bfloat16 and a_out.dtype == jnp.bfloat16

    # O(N*D) cast only (negligible vs the O(N^2) A streams); ideally the producer
    # of `hidden` already emits bf16.
    hidden_b = hidden.astype(jnp.bfloat16)

    grid = (N // TN,)

    def rows(i):    # tiled along output rows
        return (i, 0)

    def whole(i):   # resident across the whole grid
        return (0, 0)

    in_specs = [
        pl.BlockSpec((TN, N), rows),            # a_in row tile (bf16)
        pl.BlockSpec((TN, N), rows),            # a_out row tile (bf16)
        pl.BlockSpec((N, D), whole),            # hidden_all (bf16, resident)
        pl.BlockSpec((2 * D, 3 * D), whole),    # w_cat
        pl.BlockSpec((D, 3 * D), whole),        # w_hh
        pl.BlockSpec((1, 3 * D), whole),        # b_in_ih
        pl.BlockSpec((1, 3 * D), whole),        # b_out_ih
        pl.BlockSpec((1, 3 * D), whole),        # b_gi
        pl.BlockSpec((1, D), whole),            # b_hn
    ]
    out_spec = pl.BlockSpec((TN, D), rows)

    # Explicit scoped-VMEM budget: double-buffered A tiles dominate.
    a_bytes = 2  # bf16
    needed = (
        2 * 2 * TN * N * a_bytes          # two A streams, double-buffered
        + 2 * N * D * 2                   # resident hidden_all (conservative x2)
        + 2 * (2 * D * 3 * D + D * 3 * D) * 2   # bf16 weights
        + 2 * (3 * 3 * D + D) * 4         # f32 biases
        + 2 * 2 * TN * D * 4              # f32 output, double-buffered
        + (4 << 20)                       # slack for in-kernel intermediates
    )
    vmem_limit = int(min(max(needed, 16 << 20), 64 << 20))  # stay within v7x per-TC VMEM

    return pl.pallas_call(
        srgnn_cell_kernel,
        out_shape=jax.ShapeDtypeStruct((N, D), jnp.float32),
        grid=grid,
        in_specs=in_specs,
        out_specs=out_spec,
        compiler_params=pltpu.CompilerParams(
            dimension_semantics=("parallel",),   # independent row tiles
            vmem_limit_bytes=vmem_limit,
        ),
    )(a_in, a_out, hidden_b,
      prep["w_cat"], prep["w_hh"],
      prep["b_in_ih"], prep["b_out_ih"], prep["b_gi"], prep["b_hn"])


def build_mean_agg_matrix(edge_index, num_nodes, dtype=jnp.bfloat16):
    """A[dst, src] = (#edges src->dst) / in_deg(dst); zero-degree rows stay 0
    (matches PyG scatter-mean which yields 0 for empty neighborhoods).
    Produced directly in the kernel streaming dtype (done once per graph)."""
    src = edge_index[0]
    dst = edge_index[1]
    A = jnp.zeros((num_nodes, num_nodes), jnp.float32)
    A = A.at[dst, src].add(1.0)
    deg = A.sum(axis=1, keepdims=True)
    return (A / jnp.maximum(deg, 1.0)).astype(dtype)


def init_params(key, dim):
    stdv = 1.0 / jnp.sqrt(jnp.float32(dim))
    ks = jax.random.split(key, 8)

    def u(k, shape):
        return jax.random.uniform(k, shape, jnp.float32, minval=-stdv, maxval=stdv)

    # lin_ih weight is [2D, 3D]; split into the two row-blocks (input_in / input_out).
    w_ih = u(ks[4], (2 * dim, 3 * dim))
    return {
        "w_in":  u(ks[0], (dim, dim)),
        "b_in":  u(ks[1], (1, dim)),
        "w_out": u(ks[2], (dim, dim)),
        "b_out": u(ks[3], (1, dim)),
        "w_ih1": w_ih[:dim, :],
        "w_ih2": w_ih[dim:, :],
        "b_ih":  u(ks[5], (1, 3 * dim)),
        "w_hh":  u(ks[6], (dim, 3 * dim)),
        "b_hh":  u(ks[7], (1, 3 * dim)),
    }


def srgnn_cell_reference(hidden, a_in, a_out, p):
    """Pure-JAX f32 reference mirroring the PyTorch forward (no folding)."""
    x_in = hidden @ p["w_in"] + p["b_in"]
    input_in = a_in @ x_in
    x_out = hidden @ p["w_out"] + p["b_out"]
    input_out = a_out @ x_out
    gi = input_in @ p["w_ih1"] + input_out @ p["w_ih2"] + p["b_ih"]
    gh = hidden @ p["w_hh"] + p["b_hh"]
    D = hidden.shape[1]
    i_r, i_i, i_n = gi[:, :D], gi[:, D:2 * D], gi[:, 2 * D:]
    h_r, h_i, h_n = gh[:, :D], gh[:, D:2 * D], gh[:, 2 * D:]
    reset_gate = jax.nn.sigmoid(i_r + h_r)
    input_gate = jax.nn.sigmoid(i_i + h_i)
    new_gate = jnp.tanh(i_n + reset_gate * h_n)
    return (1.0 - input_gate) * hidden + input_gate * new_gate


if __name__ == "__main__":
    key = jax.random.PRNGKey(0)
    k_param, k_hidden = jax.random.split(key)

    num_nodes = 256   # 2 row tiles of 128
    dim = 128         # lane-aligned feature dim

    params = init_params(k_param, dim)
    prep = prepare_params(params, dim)          # one-time parameter folding
    hidden = jax.random.normal(k_hidden, (num_nodes, dim), jnp.float32)

    # Deterministic session graph: a chain plus pseudo-random extra edges,
    # with duplicate edges, a node (0) with no in-edges and a node (n-1) with
    # no out-edges (exercises the zero-degree / rowsum==0 path).
    n = num_nodes
    chain_src = jnp.arange(0, n - 1, dtype=jnp.int32)
    chain_dst = jnp.arange(1, n, dtype=jnp.int32)
    idx = jnp.arange(n, dtype=jnp.int32)
    extra_src = (idx * 13 + 7) % (n - 1)        # never n-1
    extra_dst = (idx * 29 + 3) % (n - 1) + 1    # never 0
    edge_index = jnp.stack([
        jnp.concatenate([chain_src, extra_src, extra_src[:8]]),
        jnp.concatenate([chain_dst, extra_dst, extra_dst[:8]]),
    ])

    # Built once per graph, directly in the streaming dtype (bf16).
    a_in = build_mean_agg_matrix(edge_index, n)                 # original edge_index
    a_out = build_mean_agg_matrix(edge_index[::-1], n)          # torch.flip(edge_index, [0])

    hy = srgnn_cell(hidden, a_in, a_out, prep, tile_rows=128)
    hy = jax.block_until_ready(hy)

    # f32 reference uses full-precision aggregation matrices.
    a_in_f32 = build_mean_agg_matrix(edge_index, n, dtype=jnp.float32)
    a_out_f32 = build_mean_agg_matrix(edge_index[::-1], n, dtype=jnp.float32)
    hy_ref = srgnn_cell_reference(hidden, a_in_f32, a_out_f32, params)

    assert hy.shape == (n, dim)
    # bf16 matmul operands / bf16 A stream (f32 accumulation & gating) -> loose tolerance.
    assert jnp.allclose(hy, hy_ref, atol=5e-2, rtol=5e-2), float(jnp.max(jnp.abs(hy - hy_ref)))

    print("KERNEL_OK")
</pallas_src>

<mosaic_0001>
module attributes {stable_mosaic.version = 11 : i64} {
  func.func @srgnn_cell_kernel(%arg0: i32, %arg1: memref<128x256xbf16, #tpu.memory_space<vmem>>, %arg2: memref<128x256xbf16, #tpu.memory_space<vmem>>, %arg3: memref<256x128xbf16, #tpu.memory_space<vmem>>, %arg4: memref<256x384xbf16, #tpu.memory_space<vmem>>, %arg5: memref<128x384xbf16, #tpu.memory_space<vmem>>, %arg6: memref<1x384xf32, #tpu.memory_space<vmem>>, %arg7: memref<1x384xf32, #tpu.memory_space<vmem>>, %arg8: memref<1x384xf32, #tpu.memory_space<vmem>>, %arg9: memref<1x128xf32, #tpu.memory_space<vmem>>, %arg10: memref<128x128xf32, #tpu.memory_space<vmem>>) attributes {dimension_semantics = [#tpu.dimension_semantics<parallel>], iteration_bounds = array<i64: 2>, scalar_prefetch = 0 : i64, scratch_operands = 0 : i64, tpu.core_type = #tpu.core_type<tc>, window_params = [{transform_indices = @transform_0, window_bounds = array<i64: 128, 256>}, {transform_indices = @transform_1, window_bounds = array<i64: 128, 256>}, {pipeline_mode = #tpu.pipeline_mode<synchronous>, transform_indices = @transform_2, window_bounds = array<i64: 256, 128>}, {pipeline_mode = #tpu.pipeline_mode<synchronous>, transform_indices = @transform_3, window_bounds = array<i64: 256, 384>}, {pipeline_mode = #tpu.pipeline_mode<synchronous>, transform_indices = @transform_4, window_bounds = array<i64: 128, 384>}, {pipeline_mode = #tpu.pipeline_mode<synchronous>, transform_indices = @transform_5, window_bounds = array<i64: 1, 384>}, {pipeline_mode = #tpu.pipeline_mode<synchronous>, transform_indices = @transform_6, window_bounds = array<i64: 1, 384>}, {pipeline_mode = #tpu.pipeline_mode<synchronous>, transform_indices = @transform_7, window_bounds = array<i64: 1, 384>}, {pipeline_mode = #tpu.pipeline_mode<synchronous>, transform_indices = @transform_8, window_bounds = array<i64: 1, 128>}, {transform_indices = @transform_9, window_bounds = array<i64: 128, 128>}]} {
    %c0 = arith.constant 0 : index
    %c0_0 = arith.constant 0 : index
    %0 = vector.load %arg1[%c0, %c0_0] : memref<128x256xbf16, #tpu.memory_space<vmem>>, vector<128x256xbf16>
    %c0_1 = arith.constant 0 : index
    %c0_2 = arith.constant 0 : index
    %1 = vector.load %arg2[%c0_1, %c0_2] : memref<128x256xbf16, #tpu.memory_space<vmem>>, vector<128x256xbf16>
    %c0_3 = arith.constant 0 : index
    %c0_4 = arith.constant 0 : index
    %2 = vector.load %arg3[%c0_3, %c0_4] : memref<256x128xbf16, #tpu.memory_space<vmem>>, vector<256x128xbf16>
    %cst = arith.constant dense<0.000000e+00> : vector<128x128xf32>
    %3 = tpu.matmul %0, %2, %cst {dimension_numbers = #tpu.dot_dimension_numbers<[1], [0], [0], [1], [0, 0, 1, 1], [], []>} : vector<128x256xbf16>, vector<256x128xbf16>, vector<128x128xf32> -> vector<128x128xf32>
    %c0_5 = arith.constant 0 : index
    %c0_6 = arith.constant 0 : index
    %4 = vector.load %arg3[%c0_5, %c0_6] : memref<256x128xbf16, #tpu.memory_space<vmem>>, vector<256x128xbf16>
    %cst_7 = arith.constant dense<0.000000e+00> : vector<128x128xf32>
    %5 = tpu.matmul %1, %4, %cst_7 {dimension_numbers = #tpu.dot_dimension_numbers<[1], [0], [0], [1], [0, 0, 1, 1], [], []>} : vector<128x256xbf16>, vector<256x128xbf16>, vector<128x128xf32> -> vector<128x128xf32>
    %6 = arith.extf %0 : vector<128x256xbf16> to vector<128x256xf32>
    %cst_8 = arith.constant dense<0.000000e+00> : vector<128xf32>
    %7 = vector.multi_reduction <add>, %6, %cst_8 [1] : vector<128x256xf32> to vector<128xf32>
    %8 = vector.shape_cast %7 : vector<128xf32> to vector<128x1xf32>
    %9 = arith.extf %1 : vector<128x256xbf16> to vector<128x256xf32>
    %cst_9 = arith.constant dense<0.000000e+00> : vector<128xf32>
    %10 = vector.multi_reduction <add>, %9, %cst_9 [1] : vector<128x256xf32> to vector<128xf32>
    %11 = vector.shape_cast %10 : vector<128xf32> to vector<128x1xf32>
    %12 = tpu.concatenate %3, %5 in 1 : vector<128x128xf32>, vector<128x128xf32> -> vector<128x256xf32>
    %13 = arith.truncf %12 : vector<128x256xf32> to vector<128x256xbf16>
    %c0_10 = arith.constant 0 : index
    %c0_11 = arith.constant 0 : index
    %14 = vector.load %arg4[%c0_10, %c0_11] : memref<256x384xbf16, #tpu.memory_space<vmem>>, vector<256x384xbf16>
    %cst_12 = arith.constant dense<0.000000e+00> : vector<128x384xf32>
    %15 = tpu.matmul %13, %14, %cst_12 {dimension_numbers = #tpu.dot_dimension_numbers<[1], [0], [0], [1], [0, 0, 1, 1], [], []>} : vector<128x256xbf16>, vector<256x384xbf16>, vector<128x384xf32> -> vector<128x384xf32>
    %c0_13 = arith.constant 0 : index
    %c0_14 = arith.constant 0 : index
    %16 = vector.load %arg6[%c0_13, %c0_14] : memref<1x384xf32, #tpu.memory_space<vmem>>, vector<1x384xf32>
    %17 = vector.broadcast %8 : vector<128x1xf32> to vector<128x384xf32>
    %18 = vector.broadcast %16 : vector<1x384xf32> to vector<128x384xf32>
    %19 = arith.mulf %17, %18 : vector<128x384xf32>
    %20 = arith.addf %15, %19 : vector<128x384xf32>
    %c0_15 = arith.constant 0 : index
    %c0_16 = arith.constant 0 : index
    %21 = vector.load %arg7[%c0_15, %c0_16] : memref<1x384xf32, #tpu.memory_space<vmem>>, vector<1x384xf32>
    %22 = vector.broadcast %11 : vector<128x1xf32> to vector<128x384xf32>
    %23 = vector.broadcast %21 : vector<1x384xf32> to vector<128x384xf32>
    %24 = arith.mulf %22, %23 : vector<128x384xf32>
    %25 = arith.addf %20, %24 : vector<128x384xf32>
    %c0_17 = arith.constant 0 : index
    %c0_18 = arith.constant 0 : index
    %26 = vector.load %arg8[%c0_17, %c0_18] : memref<1x384xf32, #tpu.memory_space<vmem>>, vector<1x384xf32>
    %27 = vector.broadcast %26 : vector<1x384xf32> to vector<128x384xf32>
    %28 = arith.addf %25, %27 : vector<128x384xf32>
    %c128_i32 = arith.constant 128 : i32
    %29 = arith.muli %arg0, %c128_i32 : i32
    %30 = tpu.assume_multiple %29, 128 : i32
    %31 = arith.index_cast %30 : i32 to index
    %c0_19 = arith.constant 0 : index
    %32 = vector.load %arg3[%31, %c0_19] : memref<256x128xbf16, #tpu.memory_space<vmem>>, vector<128x128xbf16>
    %c0_20 = arith.constant 0 : index
    %c0_21 = arith.constant 0 : index
    %33 = vector.load %arg5[%c0_20, %c0_21] : memref<128x384xbf16, #tpu.memory_space<vmem>>, vector<128x384xbf16>
    %cst_22 = arith.constant dense<0.000000e+00> : vector<128x384xf32>
    %34 = tpu.matmul %32, %33, %cst_22 {dimension_numbers = #tpu.dot_dimension_numbers<[1], [0], [0], [1], [0, 0, 1, 1], [], []>} : vector<128x128xbf16>, vector<128x384xbf16>, vector<128x384xf32> -> vector<128x384xf32>
    %35 = arith.extf %32 : vector<128x128xbf16> to vector<128x128xf32>
    %36 = vector.extract_strided_slice %28 {offsets = [0, 0], sizes = [128, 128], strides = [1, 1]} : vector<128x384xf32> to vector<128x128xf32>
    %37 = vector.extract_strided_slice %28 {offsets = [0, 128], sizes = [128, 128], strides = [1, 1]} : vector<128x384xf32> to vector<128x128xf32>
    %38 = vector.extract_strided_slice %28 {offsets = [0, 256], sizes = [128, 128], strides = [1, 1]} : vector<128x384xf32> to vector<128x128xf32>
    %39 = vector.extract_strided_slice %34 {offsets = [0, 0], sizes = [128, 128], strides = [1, 1]} : vector<128x384xf32> to vector<128x128xf32>
    %40 = vector.extract_strided_slice %34 {offsets = [0, 128], sizes = [128, 128], strides = [1, 1]} : vector<128x384xf32> to vector<128x128xf32>
    %41 = vector.extract_strided_slice %34 {offsets = [0, 256], sizes = [128, 128], strides = [1, 1]} : vector<128x384xf32> to vector<128x128xf32>
    %c0_23 = arith.constant 0 : index
    %c0_24 = arith.constant 0 : index
    %42 = vector.load %arg9[%c0_23, %c0_24] : memref<1x128xf32, #tpu.memory_space<vmem>>, vector<1x128xf32>
    %43 = vector.broadcast %42 : vector<1x128xf32> to vector<128x128xf32>
    %44 = arith.addf %41, %43 : vector<128x128xf32>
    %45 = arith.addf %36, %39 : vector<128x128xf32>
    %46 = arith.negf %45 : vector<128x128xf32>
    %47 = math.exp %46 : vector<128x128xf32>
    %cst_25 = arith.constant 1.000000e+00 : f32
    %48 = vector.broadcast %cst_25 : f32 to vector<128x128xf32>
    %49 = arith.addf %48, %47 : vector<128x128xf32>
    %50 = arith.divf %48, %49 : vector<128x128xf32>
    %51 = arith.addf %37, %40 : vector<128x128xf32>
    %52 = arith.negf %51 : vector<128x128xf32>
    %53 = math.exp %52 : vector<128x128xf32>
    %cst_26 = arith.constant 1.000000e+00 : f32
    %54 = vector.broadcast %cst_26 : f32 to vector<128x128xf32>
    %55 = arith.addf %54, %53 : vector<128x128xf32>
    %56 = arith.divf %54, %55 : vector<128x128xf32>
    %57 = arith.mulf %50, %44 : vector<128x128xf32>
    %58 = arith.addf %38, %57 : vector<128x128xf32>
    %59 = math.tanh %58 : vector<128x128xf32>
    %cst_27 = arith.constant 1.000000e+00 : f32
    %60 = vector.broadcast %cst_27 : f32 to vector<128x128xf32>
    %61 = arith.subf %60, %56 : vector<128x128xf32>
    %62 = arith.mulf %61, %35 : vector<128x128xf32>
    %63 = arith.mulf %56, %59 : vector<128x128xf32>
    %64 = arith.addf %62, %63 : vector<128x128xf32>
    %c0_28 = arith.constant 0 : index
    %c0_29 = arith.constant 0 : index
    %65 = vector.load %arg10[%c0_28, %c0_29] : memref<128x128xf32, #tpu.memory_space<vmem>>, vector<128x128xf32>
    tpu.vector_store %arg10[%c0_28, %c0_29], %64 {strides = array<i32>} : memref<128x128xf32, #tpu.memory_space<vmem>>, vector<128x128xf32>,
    return
  }
  func.func @transform_0(%arg0: i32) -> (i32, i32) {
    %c0_i32 = arith.constant 0 : i32
    %c0_i32_0 = arith.constant 0 : i32
    return %arg0, %c0_i32 : i32, i32
  }
  func.func @transform_1(%arg0: i32) -> (i32, i32) {
    %c0_i32 = arith.constant 0 : i32
    %c0_i32_0 = arith.constant 0 : i32
    return %arg0, %c0_i32 : i32, i32
  }
  func.func @transform_2(%arg0: i32) -> (i32, i32) {
    %c0_i32 = arith.constant 0 : i32
    %c0_i32_0 = arith.constant 0 : i32
    %c0_i32_1 = arith.constant 0 : i32
    return %c0_i32, %c0_i32_0 : i32, i32
  }
  func.func @transform_3(%arg0: i32) -> (i32, i32) {
    %c0_i32 = arith.constant 0 : i32
    %c0_i32_0 = arith.constant 0 : i32
    %c0_i32_1 = arith.constant 0 : i32
    return %c0_i32, %c0_i32_0 : i32, i32
  }
  func.func @transform_4(%arg0: i32) -> (i32, i32) {
    %c0_i32 = arith.constant 0 : i32
    %c0_i32_0 = arith.constant 0 : i32
    %c0_i32_1 = arith.constant 0 : i32
    return %c0_i32, %c0_i32_0 : i32, i32
  }
  func.func @transform_5(%arg0: i32) -> (i32, i32) {
    %c0_i32 = arith.constant 0 : i32
    %c0_i32_0 = arith.constant 0 : i32
    %c0_i32_1 = arith.constant 0 : i32
    return %c0_i32, %c0_i32_0 : i32, i32
  }
  func.func @transform_6(%arg0: i32) -> (i32, i32) {
    %c0_i32 = arith.constant 0 : i32
    %c0_i32_0 = arith.constant 0 : i32
    %c0_i32_1 = arith.constant 0 : i32
    return %c0_i32, %c0_i32_0 : i32, i32
  }
  func.func @transform_7(%arg0: i32) -> (i32, i32) {
    %c0_i32 = arith.constant 0 : i32
    %c0_i32_0 = arith.constant 0 : i32
    %c0_i32_1 = arith.constant 0 : i32
    return %c0_i32, %c0_i32_0 : i32, i32
  }
  func.func @transform_8(%arg0: i32) -> (i32, i32) {
    %c0_i32 = arith.constant 0 : i32
    %c0_i32_0 = arith.constant 0 : i32
    %c0_i32_1 = arith.constant 0 : i32
    return %c0_i32, %c0_i32_0 : i32, i32
  }
  func.func @transform_9(%arg0: i32) -> (i32, i32) {
    %c0_i32 = arith.constant 0 : i32
    %c0_i32_0 = arith.constant 0 : i32
    return %arg0, %c0_i32 : i32, i32
  }
}

</mosaic_0001>

<llo_original>
// kernel: tpu_custom_call.1
$region0: #{tpu_custom_call.1}
  #allocation0 [shape = 'u32[]', space=smem, size = 0x4, offset = 0x4, fixed_abs, tag = 'smem constant byte address 0x4 - core index']
  #allocation1 [shape = 'u32[144,128]{1,0:T(1,128)}', space=vmem, size = 0x12000, scoped, tag = 'internal scratch']
  %s0 = inlined_call_operand.hbm [shape: bf16[256,256], index: 0, kind: input, shape index: {}]
  %s1 = inlined_call_operand.hbm [shape: bf16[256,256], index: 1, kind: input, shape index: {}]
  %s2 = inlined_call_operand.hbm [shape: bf16[256,128], index: 2, kind: input, shape index: {}]
  %s3 = inlined_call_operand.hbm [shape: bf16[256,384], index: 3, kind: input, shape index: {}]
  %s4 = inlined_call_operand.hbm [shape: bf16[128,384], index: 4, kind: input, shape index: {}]
  %s5 = inlined_call_operand.vmem [shape: f32[1,384], index: 5, kind: input, shape index: {}]
  %s6 = inlined_call_operand.vmem [shape: f32[1,384], index: 6, kind: input, shape index: {}]
  %s7 = inlined_call_operand.vmem [shape: f32[1,384], index: 7, kind: input, shape index: {}]
  %s8 = inlined_call_operand.vmem [shape: f32[1,128], index: 8, kind: input, shape index: {}]
  %s9 = inlined_call_operand.hbm [shape: f32[256,128], index: 9, kind: output, shape index: {}]
  %s10 = sld [smem:[#allocation0]]
  $region89: #{tpu_custom_call.1} parent=0
    _
  %s12 = ssub.s32 1, %s10
  %s13 = scalar_select 0, %s12, %s10
  $region1: #{tpu_custom_call.1} parent=0
    #allocation2 [shape = 'u8[131072]{0}', space=vmem, size = 0x20000, scoped, tag = 'input window, operand 0']
    #allocation3 [shape = 's32[2]{0}', space=sflag, size = 0x8, scoped, tag = 'scoped memory for tpu_custom_call.1']
    #allocation4 [shape = 's32[2]{0}', space=sflag, size = 0x8, scoped, tag = 'scoped memory for tpu_custom_call.1']
    #allocation5 [shape = 'u8[131072]{0}', space=vmem, size = 0x20000, scoped, tag = 'input window, operand 1']
    #allocation6 [shape = 's32[2]{0}', space=sflag, size = 0x8, scoped, tag = 'scoped memory for tpu_custom_call.1']
    #allocation7 [shape = 'u8[65536]{0}', space=vmem, size = 0x10000, scoped, tag = 'input window, operand 2, single buffered']
    #allocation8 [shape = 'u8[196608]{0}', space=vmem, size = 0x30000, scoped, tag = 'input window, operand 3, single buffered']
    #allocation9 [shape = 's32[1]{0}', space=sflag, size = 0x4, scoped, tag = 'scoped memory for tpu_custom_call.1']
    #allocation10 [shape = 'u8[98304]{0}', space=vmem, size = 0x18000, scoped, tag = 'input window, operand 4, single buffered']
    #allocation11 [shape = 'u8[131072]{0}', space=vmem, size = 0x20000, scoped, tag = 'output window, operand 0']
    %14 = vsyncpa [#allocation3], 0
    %s15 = scalar_lea.sflag [#allocation3], 1
    %16 = vsyncpa %s15, 0
    %17 = vsyncpa [#allocation6], 0
    %s18 = scalar_lea.sflag [#allocation6], 1
    %19 = vsyncpa %s18, 0
    %20 = vsyncpa [#allocation9], 0
    %21 = vsyncpa [#allocation4], 0
    %s22 = scalar_lea.sflag [#allocation4], 1
    %23 = vsyncpa %s22, 0
    loop: start=0, step=1, limit=4
    $region2: #{tpu_custom_call.1} parent=1 // loop_pre_header
      _
    $region3: #{tpu_custom_call.1} parent=1 // loop_header
      %s25 = sphi 0, %s29
      %p26 = scmp.ge.s32.totalorder %s25, 4
      %s35 = sphi 0, %s37
      %s38 = sphi 0, %s35
      %s39 = sphi 0, %s38
      %s55 = sphi 0, %s39
      %s61 = sphi 0, %s63
      %s64 = sphi 0, %s61
      %s65 = sphi 0, %s64
      %s81 = sphi 0, %s65
      %s85 = sphi 0, %s85
      %s87 = sphi 0, %s85
      %s88 = sphi 0, %s87
      %s102 = sphi 0, %s88
      %s106 = sphi 0, %s106
      %s108 = sphi 0, %s106
      %s109 = sphi 0, %s108
      %s123 = sphi 0, %s109
      %s127 = sphi 0, %s127
      %s129 = sphi 0, %s127
      %s130 = sphi 0, %s129
      %s144 = sphi 0, %s130
      %s148 = sphi 0, %s148
      %s150 = sphi 0, %s148
      %s151 = sphi 0, %s150
      %s165 = sphi 0, %s151
      %s169 = sphi 0, %s169
      %s171 = sphi 0, %s169
      %s172 = sphi 0, %s171
      %s186 = sphi 0, %s172
      %s190 = sphi 0, %s190
      %s192 = sphi 0, %s190
      %s193 = sphi 0, %s192
      %s207 = sphi 0, %s193
      %s211 = sphi 0, %s211
      %s213 = sphi 0, %s211
      %s214 = sphi 0, %s213
      %s228 = sphi 0, %s214
      %s234 = sphi 0, %s236
      %s237 = sphi 0, %s234
      %s238 = sphi 0, %s237
      %s254 = sphi 0, %s238
    $region4: #{tpu_custom_call.1} parent=1 // loop_header_branch
      %28 = sbr.rel (%p26) target = $region8
    $region5: #{tpu_custom_call.1} parent=1 // loop_body
      %s30 = ssub.s32 %s25, 1
      %s31 = ssub.s32 %s25, 2
      %s32 = sadd.s32 %s25, 1
      %s33 = ssub.s32 %s25, %s32
      %p34 = scmp.eq.s32.totalorder %s33, 0
      %s36 = sadd.s32 %s35, 1
      %s37 = scalar_select %p34, %s35, %s36
      %p40 = pneg %p34
      %p41 = scmp.eq.s32.totalorder %s25, 1
      %p42 = por %p40, %p41
      %p43 = scmp.ne.s32.totalorder %s35, %s38
      %p44 = scmp.eq.s32.totalorder %s25, 0
      %p45 = por %p43, %p44
      %p46 = scmp.ne.s32.totalorder %s35, %s38
      %p47 = scmp.eq.s32.totalorder %s30, 1
      %p48 = por %p46, %p47
      %p49 = scmp.ne.s32.totalorder %s38, %s39
      %p50 = scmp.eq.s32.totalorder %s30, 0
      %p51 = por %p49, %p50
      %p52 = scmp.ne.s32.totalorder %s38, %s39
      %p53 = scmp.eq.s32.totalorder %s31, 1
      %p54 = por %p52, %p53
      %p56 = scmp.ne.s32.totalorder %s39, %s55
      %p57 = scmp.eq.s32.totalorder %s31, 0
      %p58 = por %p56, %p57
      %s59 = ssub.s32 %s25, %s32
      %p60 = scmp.eq.s32.totalorder %s59, 0
      %s62 = sadd.s32 %s61, 1
      %s63 = scalar_select %p60, %s61, %s62
      %p66 = pneg %p60
      %p67 = scmp.eq.s32.totalorder %s25, 1
      %p68 = por %p66, %p67
      %p69 = scmp.ne.s32.totalorder %s61, %s64
      %p70 = scmp.eq.s32.totalorder %s25, 0
      %p71 = por %p69, %p70
      %p72 = scmp.ne.s32.totalorder %s61, %s64
      %p73 = scmp.eq.s32.totalorder %s30, 1
      %p74 = por %p72, %p73
      %p75 = scmp.ne.s32.totalorder %s64, %s65
      %p76 = scmp.eq.s32.totalorder %s30, 0
      %p77 = por %p75, %p76
      %p78 = scmp.ne.s32.totalorder %s64, %s65
      %p79 = scmp.eq.s32.totalorder %s31, 1
      %p80 = por %p78, %p79
      %p82 = scmp.ne.s32.totalorder %s65, %s81
      %p83 = scmp.eq.s32.totalorder %s31, 0
      %p84 = por %p82, %p83
      %s86 = sadd.s32 %s85, 1
      %p89 = scmp.eq.s32.totalorder %s25, 1
      %p90 = scmp.ne.s32.totalorder %s85, %s87
      %p91 = scmp.eq.s32.totalorder %s25, 0
      %p92 = por %p90, %p91
      %p93 = scmp.ne.s32.totalorder %s85, %s87
      %p94 = scmp.eq.s32.totalorder %s30, 1
      %p95 = por %p93, %p94
      %p96 = scmp.ne.s32.totalorder %s87, %s88
      %p97 = scmp.eq.s32.totalorder %s30, 0
      %p98 = por %p96, %p97
      %p99 = scmp.ne.s32.totalorder %s87, %s88
      %p100 = scmp.eq.s32.totalorder %s31, 1
      %p101 = por %p99, %p100
      %p103 = scmp.ne.s32.totalorder %s88, %s102
      %p104 = scmp.eq.s32.totalorder %s31, 0
      %p105 = por %p103, %p104
      %s107 = sadd.s32 %s106, 1
      %p110 = scmp.eq.s32.totalorder %s25, 1
      %p111 = scmp.ne.s32.totalorder %s106, %s108
      %p112 = scmp.eq.s32.totalorder %s25, 0
      %p113 = por %p111, %p112
      %p114 = scmp.ne.s32.totalorder %s106, %s108
      %p115 = scmp.eq.s32.totalorder %s30, 1
      %p116 = por %p114, %p115
      %p117 = scmp.ne.s32.totalorder %s108, %s109
      %p118 = scmp.eq.s32.totalorder %s30, 0
      %p119 = por %p117, %p118
      %p120 = scmp.ne.s32.totalorder %s108, %s109
      %p121 = scmp.eq.s32.totalorder %s31, 1
      %p122 = por %p120, %p121
      %p124 = scmp.ne.s32.totalorder %s109, %s123
      %p125 = scmp.eq.s32.totalorder %s31, 0
      %p126 = por %p124, %p125
      %s128 = sadd.s32 %s127, 1
      %p131 = scmp.eq.s32.totalorder %s25, 1
      %p132 = scmp.ne.s32.totalorder %s127, %s129
      %p133 = scmp.eq.s32.totalorder %s25, 0
      %p134 = por %p132, %p133
      %p135 = scmp.ne.s32.totalorder %s127, %s129
      %p136 = scmp.eq.s32.totalorder %s30, 1
      %p137 = por %p135, %p136
      %p138 = scmp.ne.s32.totalorder %s129, %s130
      %p139 = scmp.eq.s32.totalorder %s30, 0
      %p140 = por %p138, %p139
      %p141 = scmp.ne.s32.totalorder %s129, %s130
      %p142 = scmp.eq.s32.totalorder %s31, 1
      %p143 = por %p141, %p142
      %p145 = scmp.ne.s32.totalorder %s130, %s144
      %p146 = scmp.eq.s32.totalorder %s31, 0
      %p147 = por %p145, %p146
      %s149 = sadd.s32 %s148, 1
      %p152 = scmp.eq.s32.totalorder %s25, 1
      %p153 = scmp.ne.s32.totalorder %s148, %s150
      %p154 = scmp.eq.s32.totalorder %s25, 0
      %p155 = por %p153, %p154
      %p156 = scmp.ne.s32.totalorder %s148, %s150
      %p157 = scmp.eq.s32.totalorder %s30, 1
      %p158 = por %p156, %p157
      %p159 = scmp.ne.s32.totalorder %s150, %s151
      %p160 = scmp.eq.s32.totalorder %s30, 0
      %p161 = por %p159, %p160
      %p162 = scmp.ne.s32.totalorder %s150, %s151
      %p163 = scmp.eq.s32.totalorder %s31, 1
      %p164 = por %p162, %p163
      %p166 = scmp.ne.s32.totalorder %s151, %s165
      %p167 = scmp.eq.s32.totalorder %s31, 0
      %p168 = por %p166, %p167
      %s170 = sadd.s32 %s169, 1
      %p173 = scmp.eq.s32.totalorder %s25, 1
      %p174 = scmp.ne.s32.totalorder %s169, %s171
      %p175 = scmp.eq.s32.totalorder %s25, 0
      %p176 = por %p174, %p175
      %p177 = scmp.ne.s32.totalorder %s169, %s171
      %p178 = scmp.eq.s32.totalorder %s30, 1
      %p179 = por %p177, %p178
      %p180 = scmp.ne.s32.totalorder %s171, %s172
      %p181 = scmp.eq.s32.totalorder %s30, 0
      %p182 = por %p180, %p181
      %p183 = scmp.ne.s32.totalorder %s171, %s172
      %p184 = scmp.eq.s32.totalorder %s31, 1
      %p185 = por %p183, %p184
      %p187 = scmp.ne.s32.totalorder %s172, %s186
      %p188 = scmp.eq.s32.totalorder %s31, 0
      %p189 = por %p187, %p188
      %s191 = sadd.s32 %s190, 1
      %p194 = scmp.eq.s32.totalorder %s25, 1
      %p195 = scmp.ne.s32.totalorder %s190, %s192
      %p196 = scmp.eq.s32.totalorder %s25, 0
      %p197 = por %p195, %p196
      %p198 = scmp.ne.s32.totalorder %s190, %s192
      %p199 = scmp.eq.s32.totalorder %s30, 1
      %p200 = por %p198, %p199
      %p201 = scmp.ne.s32.totalorder %s192, %s193
      %p202 = scmp.eq.s32.totalorder %s30, 0
      %p203 = por %p201, %p202
      %p204 = scmp.ne.s32.totalorder %s192, %s193
      %p205 = scmp.eq.s32.totalorder %s31, 1
      %p206 = por %p204, %p205
      %p208 = scmp.ne.s32.totalorder %s193, %s207
      %p209 = scmp.eq.s32.totalorder %s31, 0
      %p210 = por %p208, %p209
      %s212 = sadd.s32 %s211, 1
      %p215 = scmp.eq.s32.totalorder %s25, 1
      %p216 = scmp.ne.s32.totalorder %s211, %s213
      %p217 = scmp.eq.s32.totalorder %s25, 0
      %p218 = por %p216, %p217
      %p219 = scmp.ne.s32.totalorder %s211, %s213
      %p220 = scmp.eq.s32.totalorder %s30, 1
      %p221 = por %p219, %p220
      %p222 = scmp.ne.s32.totalorder %s213, %s214
      %p223 = scmp.eq.s32.totalorder %s30, 0
      %p224 = por %p222, %p223
      %p225 = scmp.ne.s32.totalorder %s213, %s214
      %p226 = scmp.eq.s32.totalorder %s31, 1
      %p227 = por %p225, %p226
      %p229 = scmp.ne.s32.totalorder %s214, %s228
      %p230 = scmp.eq.s32.totalorder %s31, 0
      %p231 = por %p229, %p230
      %s232 = ssub.s32 %s25, %s32
      %p233 = scmp.eq.s32.totalorder %s232, 0
      %s235 = sadd.s32 %s234, 1
      %s236 = scalar_select %p233, %s234, %s235
      %p239 = pneg %p233
      %p240 = scmp.eq.s32.totalorder %s25, 1
      %p241 = por %p239, %p240
      %p242 = scmp.ne.s32.totalorder %s234, %s237
      %p243 = scmp.eq.s32.totalorder %s25, 0
      %p244 = por %p242, %p243
      %p245 = scmp.ne.s32.totalorder %s234, %s237
      %p246 = scmp.eq.s32.totalorder %s30, 1
      %p247 = por %p245, %p246
      %p248 = scmp.ne.s32.totalorder %s237, %s238
      %p249 = scmp.eq.s32.totalorder %s30, 0
      %p250 = por %p248, %p249
      %p251 = scmp.ne.s32.totalorder %s237, %s238
      %p252 = scmp.eq.s32.totalorder %s31, 1
      %p253 = por %p251, %p252
      %p255 = scmp.ne.s32.totalorder %s238, %s254
      %p256 = scmp.eq.s32.totalorder %s31, 0
      %p257 = por %p255, %p256
      %p258 = scmp.le.s32.totalorder 1, %s25
      %p259 = scmp.lt.s32.totalorder %s25, 3
      %p260 = pnand %p258, %p259
      %p261 = pneg %p260
      // Predicated region
      $region9: #{tpu_custom_call.1} parent=5 // pred_check
        _
      $region10: #{tpu_custom_call.1} parent=5 // pred_check_branch
        %263 = sbr.rel (%p260) target = $region12
      $region11: #{tpu_custom_call.1} parent=5 // pred_region
        %s264 = ssub.s32 %s25, 1
        // Predicated region
        $region13: #{tpu_custom_call.1} parent=11 // pred_check
          %p265 = pneg %p98
        $region14: #{tpu_custom_call.1} parent=11 // pred_check_branch
          %267 = sbr.rel (%p265) target = $region16
        $region15: #{tpu_custom_call.1} parent=11 // pred_region
          %s269 = ssub.s32 2048, 2048
          %270 = vsyncadd [#allocation6], %s269
          %s271 = sshll.u32 [#allocation7], 4
          %s272 = int_to_ptr.vmem [resolvable:$true] %s271
          %277 = dma.hbm_to_vmem [thread:$0]  %s2, 2048, %s272, [#allocation6], 64, 64, 4
        $region16: #{tpu_custom_call.1} parent=11 // pred_fallthru
          _
        // Predicated region
        $region17: #{tpu_custom_call.1} parent=11 // pred_check
          %p278 = pneg %p119
        $region18: #{tpu_custom_call.1} parent=11 // pred_check_branch
          %280 = sbr.rel (%p278) target = $region20
        $region19: #{tpu_custom_call.1} parent=11 // pred_region
          %s282 = ssub.s32 6144, 6144
          %283 = vsyncadd [#allocation9], %s282
          %s284 = sshll.u32 [#allocation8], 4
          %s285 = int_to_ptr.vmem [resolvable:$true] %s284
          %290 = dma.hbm_to_vmem [thread:$0]  %s3, 6144, %s285, [#allocation9], 192, 192, 12
        $region20: #{tpu_custom_call.1} parent=11 // pred_fallthru
          _
        // Predicated region
        $region21: #{tpu_custom_call.1} parent=11 // pred_check
          %p291 = pneg %p140
        $region22: #{tpu_custom_call.1} parent=11 // pred_check_branch
          %293 = sbr.rel (%p291) target = $region24
        $region23: #{tpu_custom_call.1} parent=11 // pred_region
          %s295 = ssub.s32 3072, 3072
          %296 = vsyncadd [#allocation9], %s295
          %s297 = sshll.u32 [#allocation10], 4
          %s298 = int_to_ptr.vmem [resolvable:$true] %s297
          %303 = dma.hbm_to_vmem [thread:$0]  %s4, 3072, %s298, [#allocation9], 192, 192, 12
        $region24: #{tpu_custom_call.1} parent=11 // pred_fallthru
          _
        // Predicated region
        $region25: #{tpu_custom_call.1} parent=11 // pred_check
          %p304 = pneg %p161
        $region26: #{tpu_custom_call.1} parent=11 // pred_check_branch
          %306 = sbr.rel (%p304) target = $region28
        $region27: #{tpu_custom_call.1} parent=11 // pred_region
          _
        $region28: #{tpu_custom_call.1} parent=11 // pred_fallthru
          _
        // Predicated region
        $region29: #{tpu_custom_call.1} parent=11 // pred_check
          %p307 = pneg %p182
        $region30: #{tpu_custom_call.1} parent=11 // pred_check_branch
          %309 = sbr.rel (%p307) target = $region32
        $region31: #{tpu_custom_call.1} parent=11 // pred_region
          _
        $region32: #{tpu_custom_call.1} parent=11 // pred_fallthru
          _
        // Predicated region
        $region33: #{tpu_custom_call.1} parent=11 // pred_check
          %p310 = pneg %p203
        $region34: #{tpu_custom_call.1} parent=11 // pred_check_branch
          %312 = sbr.rel (%p310) target = $region36
        $region35: #{tpu_custom_call.1} parent=11 // pred_region
          _
        $region36: #{tpu_custom_call.1} parent=11 // pred_fallthru
          _
        // Predicated region
        $region37: #{tpu_custom_call.1} parent=11 // pred_check
          %p313 = pneg %p224
        $region38: #{tpu_custom_call.1} parent=11 // pred_check_branch
          %315 = sbr.rel (%p313) target = $region40
        $region39: #{tpu_custom_call.1} parent=11 // pred_region
          _
        $region40: #{tpu_custom_call.1} parent=11 // pred_fallthru
          _
      $region12: #{tpu_custom_call.1} parent=5 // pred_fallthru
        _
      %p316 = scmp.lt.s32.totalorder %s25, 2
      // Predicated region
      $region41: #{tpu_custom_call.1} parent=5 // pred_check
        %p317 = pneg %p316
      $region42: #{tpu_custom_call.1} parent=5 // pred_check_branch
        %319 = sbr.rel (%p317) target = $region44
      $region43: #{tpu_custom_call.1} parent=5 // pred_region
        // Predicated region
        $region45: #{tpu_custom_call.1} parent=43 // pred_check
          %p320 = pneg %p45
        $region46: #{tpu_custom_call.1} parent=43 // pred_check_branch
          %322 = sbr.rel (%p320) target = $region48
        $region47: #{tpu_custom_call.1} parent=43 // pred_region
          %s323 = sand.u32 %s35, 1
          %s324 = scalar_lea.sflag [#allocation3], %s323
          %s325 = sand.u32 %s35, 1
          %s326 = smul.addr %s325, 128
          %s327 = scalar_lea.vmem [#allocation2], %s326
          %s328 = smul.u32 16, %s25
          %s330 = ssub.s32 2048, 2048
          %331 = vsyncadd %s324, %s330
          %s332 = smul.addr %s328, 2
          %s333 = smul.addr %s332, 64
          %s334 = scalar_lea.hbm %s0, %s333
          %s335 = sshll.u32 %s327, 4
          %s336 = int_to_ptr.vmem [resolvable:$true] %s335
          %341 = dma.hbm_to_vmem [thread:$0]  %s334, 2048, %s336, %s324, 128, 128, 8
        $region48: #{tpu_custom_call.1} parent=43 // pred_fallthru
          _
        // Predicated region
        $region49: #{tpu_custom_call.1} parent=43 // pred_check
          %p342 = pneg %p71
        $region50: #{tpu_custom_call.1} parent=43 // pred_check_branch
          %344 = sbr.rel (%p342) target = $region52
        $region51: #{tpu_custom_call.1} parent=43 // pred_region
          %s345 = sand.u32 %s25, 1
          %s346 = scalar_lea.sflag [#allocation6], %s345
          %s347 = sand.u32 %s61, 1
          %s348 = smul.addr %s347, 128
          %s349 = scalar_lea.vmem [#allocation5], %s348
          %s350 = smul.u32 16, %s25
          %s352 = ssub.s32 2048, 2048
          %353 = vsyncadd %s346, %s352
          %s354 = smul.addr %s350, 2
          %s355 = smul.addr %s354, 64
          %s356 = scalar_lea.hbm %s1, %s355
          %s357 = sshll.u32 %s349, 4
          %s358 = int_to_ptr.vmem [resolvable:$true] %s357
          %363 = dma.hbm_to_vmem [thread:$0]  %s356, 2048, %s358, %s346, 128, 128, 8
        $region52: #{tpu_custom_call.1} parent=43 // pred_fallthru
          _
      $region44: #{tpu_custom_call.1} parent=5 // pred_fallthru
        _
      %p364 = scmp.le.s32.totalorder 1, %s25
      %p365 = scmp.lt.s32.totalorder %s25, 3
      %p366 = pnand %p364, %p365
      %p367 = pneg %p366
      // Predicated region
      $region53: #{tpu_custom_call.1} parent=5 // pred_check
        _
      $region54: #{tpu_custom_call.1} parent=5 // pred_check_branch
        %369 = sbr.rel (%p366) target = $region56
      $region55: #{tpu_custom_call.1} parent=5 // pred_region
        %s370 = ssub.s32 %s25, 1
        %s371 = sand.u32 %s38, 1
        %s372 = scalar_lea.sflag [#allocation3], %s371
        %s373 = sand.u32 %s38, 1
        %s374 = smul.addr %s373, 128
        %s375 = scalar_lea.vmem [#allocation2], %s374
        // Predicated region
        $region57: #{tpu_custom_call.1} parent=55 // pred_check
          %p376 = pneg %p51
        $region58: #{tpu_custom_call.1} parent=55 // pred_check_branch
          %378 = sbr.rel (%p376) target = $region60
        $region59: #{tpu_custom_call.1} parent=55 // pred_region
          %379 = dma.done %s372, 2048
        $region60: #{tpu_custom_call.1} parent=55 // pred_fallthru
          _
        %s380 = sand.u32 %s30, 1
        %s381 = scalar_lea.sflag [#allocation6], %s380
        %s382 = sand.u32 %s64, 1
        %s383 = smul.addr %s382, 128
        %s384 = scalar_lea.vmem [#allocation5], %s383
        // Predicated region
        $region61: #{tpu_custom_call.1} parent=55 // pred_check
          %p385 = pneg %p77
        $region62: #{tpu_custom_call.1} parent=55 // pred_check_branch
          %387 = sbr.rel (%p385) target = $region64
        $region63: #{tpu_custom_call.1} parent=55 // pred_region
          %388 = dma.done %s381, 2048
        $region64: #{tpu_custom_call.1} parent=55 // pred_fallthru
          _
        // Predicated region
        $region65: #{tpu_custom_call.1} parent=55 // pred_check
          %p389 = pneg %p98
        $region66: #{tpu_custom_call.1} parent=55 // pred_check_branch
          %391 = sbr.rel (%p389) target = $region68
        $region67: #{tpu_custom_call.1} parent=55 // pred_region
          %392 = dma.done [#allocation6], 2048
        $region68: #{tpu_custom_call.1} parent=55 // pred_fallthru
          _
        // Predicated region
        $region69: #{tpu_custom_call.1} parent=55 // pred_check
          %p393 = pneg %p119
        $region70: #{tpu_custom_call.1} parent=55 // pred_check_branch
          %395 = sbr.rel (%p393) target = $region72
        $region71: #{tpu_custom_call.1} parent=55 // pred_region
          %396 = dma.done [#allocation9], 6144
        $region72: #{tpu_custom_call.1} parent=55 // pred_fallthru
          _
        // Predicated region
        $region73: #{tpu_custom_call.1} parent=55 // pred_check
          %p397 = pneg %p140
        $region74: #{tpu_custom_call.1} parent=55 // pred_check_branch
          %399 = sbr.rel (%p397) target = $region76
        $region75: #{tpu_custom_call.1} parent=55 // pred_region
          %400 = dma.done [#allocation9], 3072
        $region76: #{tpu_custom_call.1} parent=55 // pred_fallthru
          _
        %s401 = sand.u32 %s38, 1
        %s402 = scalar_lea.sflag [#allocation3], %s401
        %s403 = sand.u32 %s38, 1
        %s404 = smul.addr %s403, 128
        %s405 = scalar_lea.vmem [#allocation2], %s404
        %p406 = pneg %p51
        %p407 = pneg %p48
        %s408 = sand.u32 %s30, 1
        %s409 = scalar_lea.sflag [#allocation6], %s408
        %s410 = sand.u32 %s64, 1
        %s411 = smul.addr %s410, 128
        %s412 = scalar_lea.vmem [#allocation5], %s411
        %p413 = pneg %p77
        %p414 = pneg %p74
        %p415 = pneg %p98
        %p416 = pneg %p95
        %p417 = pneg %p119
        %p418 = pneg %p116
        %p419 = pneg %p140
        %p420 = pneg %p137
        %p421 = pneg %p161
        %p422 = pneg %p158
        %p423 = pneg %p182
        %p424 = pneg %p179
        %p425 = pneg %p203
        %p426 = pneg %p200
        %p427 = pneg %p224
        %p428 = pneg %p221
        %p429 = pneg %p250
        %p430 = pneg %p247
        %s431 = sand.u32 %s237, 1
        %s432 = scalar_lea.sflag [#allocation4], %s431
        %s433 = sand.u32 %s237, 1
        %s434 = smul.addr %s433, 128
        %s435 = scalar_lea.vmem [#allocation11], %s434
        %s436 = smul.u32 16, %s30
        %s437 = smul.u32 16, %s30
        %s438 = smul.u32 16, %s30
        %v440 = vld [vmem:[%s375] sm:$0xff]
        %v441 = vld [vmem:[%s375 + $0x8] sm:$0xff]
        %v442 = vld [vmem:[%s375 + $0x10] sm:$0xff]
        %v443 = vld [vmem:[%s375 + $0x18] sm:$0xff]
        %v444 = vld [vmem:[%s375 + $0x20] sm:$0xff]
        %v445 = vld [vmem:[%s375 + $0x28] sm:$0xff]
        %v446 = vld [vmem:[%s375 + $0x30] sm:$0xff]
        %v447 = vld [vmem:[%s375 + $0x38] sm:$0xff]
        %v448 = vld [vmem:[%s375 + $0x40] sm:$0xff]
        %v449 = vld [vmem:[%s375 + $0x48] sm:$0xff]
        %v450 = vld [vmem:[%s375 + $0x50] sm:$0xff]
        %v451 = vld [vmem:[%s375 + $0x58] sm:$0xff]
        %v452 = vld [vmem:[%s375 + $0x60] sm:$0xff]
        %v453 = vld [vmem:[%s375 + $0x68] sm:$0xff]
        %v454 = vld [vmem:[%s375 + $0x70] sm:$0xff]
        %v455 = vld [vmem:[%s375 + $0x78] sm:$0xff]
        %v456 = vld [vmem:[%s384] sm:$0xff]
        %v457 = vld [vmem:[%s384 + $0x8] sm:$0xff]
        %v458 = vld [vmem:[%s384 + $0x10] sm:$0xff]
        %v459 = vld [vmem:[%s384 + $0x18] sm:$0xff]
        %v460 = vld [vmem:[%s384 + $0x20] sm:$0xff]
        %v461 = vld [vmem:[%s384 + $0x28] sm:$0xff]
        %v462 = vld [vmem:[%s384 + $0x30] sm:$0xff]
        %v463 = vld [vmem:[%s384 + $0x38] sm:$0xff]
        %v464 = vld [vmem:[%s384 + $0x40] sm:$0xff]
        %v465 = vld [vmem:[%s384 + $0x48] sm:$0xff]
        %v466 = vld [vmem:[%s384 + $0x50] sm:$0xff]
        %v467 = vld [vmem:[%s384 + $0x58] sm:$0xff]
        %v468 = vld [vmem:[%s384 + $0x60] sm:$0xff]
        %v469 = vld [vmem:[%s384 + $0x68] sm:$0xff]
        %v470 = vld [vmem:[%s384 + $0x70] sm:$0xff]
        %v471 = vld [vmem:[%s384 + $0x78] sm:$0xff]
        %v472 = vld [vmem:[#allocation7] sm:$0xf]
        %v473 = vld [vmem:[#allocation7 + $0x4] sm:$0xf]
        %v474 = vld [vmem:[#allocation7 + $0x8] sm:$0xf]
        %v475 = vld [vmem:[#allocation7 + $0xc] sm:$0xf]
        %v476 = vld [vmem:[#allocation7 + $0x10] sm:$0xf]
        %v477 = vld [vmem:[#allocation7 + $0x14] sm:$0xf]
        %v478 = vld [vmem:[#allocation7 + $0x18] sm:$0xf]
        %v479 = vld [vmem:[#allocation7 + $0x1c] sm:$0xf]
        %v480 = vld [vmem:[#allocation7 + $0x20] sm:$0xf]
        %v481 = vld [vmem:[#allocation7 + $0x24] sm:$0xf]
        %v482 = vld [vmem:[#allocation7 + $0x28] sm:$0xf]
        %v483 = vld [vmem:[#allocation7 + $0x2c] sm:$0xf]
        %v484 = vld [vmem:[#allocation7 + $0x30] sm:$0xf]
        %v485 = vld [vmem:[#allocation7 + $0x34] sm:$0xf]
        %v486 = vld [vmem:[#allocation7 + $0x38] sm:$0xf]
        %v487 = vld [vmem:[#allocation7 + $0x3c] sm:$0xf]
        %v488 = vld [vmem:[#allocation7 + $0x40] sm:$0xf]
        %v489 = vld [vmem:[#allocation7 + $0x44] sm:$0xf]
        %v490 = vld [vmem:[#allocation7 + $0x48] sm:$0xf]
        %v491 = vld [vmem:[#allocation7 + $0x4c] sm:$0xf]
        %v492 = vld [vmem:[#allocation7 + $0x50] sm:$0xf]
        %v493 = vld [vmem:[#allocation7 + $0x54] sm:$0xf]
        %v494 = vld [vmem:[#allocation7 + $0x58] sm:$0xf]
        %v495 = vld [vmem:[#allocation7 + $0x5c] sm:$0xf]
        %v496 = vld [vmem:[#allocation7 + $0x60] sm:$0xf]
        %v497 = vld [vmem:[#allocation7 + $0x64] sm:$0xf]
        %v498 = vld [vmem:[#allocation7 + $0x68] sm:$0xf]
        %v499 = vld [vmem:[#allocation7 + $0x6c] sm:$0xf]
        %v500 = vld [vmem:[#allocation7 + $0x70] sm:$0xf]
        %v501 = vld [vmem:[#allocation7 + $0x74] sm:$0xf]
        %v502 = vld [vmem:[#allocation7 + $0x78] sm:$0xf]
        %v503 = vld [vmem:[#allocation7 + $0x7c] sm:$0xf]
        %v520 = vunpack.c.l.b16 %v440
        %v521 = vunpack.c.h.b16 %v440
        %v522 = vunpack.c.l.b16 %v441
        %v523 = vunpack.c.h.b16 %v441
        %v524 = vunpack.c.l.b16 %v442
        %v525 = vunpack.c.h.b16 %v442
        %v526 = vunpack.c.l.b16 %v443
        %v527 = vunpack.c.h.b16 %v443
        %v528 = vunpack.c.l.b16 %v444
        %v529 = vunpack.c.h.b16 %v444
        %v530 = vunpack.c.l.b16 %v445
        %v531 = vunpack.c.h.b16 %v445
        %v532 = vunpack.c.l.b16 %v446
        %v533 = vunpack.c.h.b16 %v446
        %v534 = vunpack.c.l.b16 %v447
        %v535 = vunpack.c.h.b16 %v447
        %v536 = vunpack.c.l.b16 %v448
        %v537 = vunpack.c.h.b16 %v448
        %v538 = vunpack.c.l.b16 %v449
        %v539 = vunpack.c.h.b16 %v449
        %v540 = vunpack.c.l.b16 %v450
        %v541 = vunpack.c.h.b16 %v450
        %v542 = vunpack.c.l.b16 %v451
        %v543 = vunpack.c.h.b16 %v451
        %v544 = vunpack.c.l.b16 %v452
        %v545 = vunpack.c.h.b16 %v452
        %v546 = vunpack.c.l.b16 %v453
        %v547 = vunpack.c.h.b16 %v453
        %v548 = vunpack.c.l.b16 %v454
        %v549 = vunpack.c.h.b16 %v454
        %v550 = vunpack.c.l.b16 %v455
        %v551 = vunpack.c.h.b16 %v455
        %v552 = vpack.c.b16 %v522, %v520
        %v553 = vpack.c.b16 %v523, %v521
        %v554 = vpack.c.b16 %v526, %v524
        %v555 = vpack.c.b16 %v527, %v525
        %v556 = vpack.c.b16 %v530, %v528
        %v557 = vpack.c.b16 %v531, %v529
        %v558 = vpack.c.b16 %v534, %v532
        %v559 = vpack.c.b16 %v535, %v533
        %v560 = vpack.c.b16 %v538, %v536
        %v561 = vpack.c.b16 %v539, %v537
        %v562 = vpack.c.b16 %v542, %v540
        %v563 = vpack.c.b16 %v543, %v541
        %v564 = vpack.c.b16 %v546, %v544
        %v565 = vpack.c.b16 %v547, %v545
        %v566 = vpack.c.b16 %v550, %v548
        %v567 = vpack.c.b16 %v551, %v549
        %v616 = vunpack.c.l.b16 %v472
        %v617 = vunpack.c.l.b16 %v473
        %v618 = vunpack.c.l.b16 %v474
        %v619 = vunpack.c.l.b16 %v475
        %v620 = vunpack.c.l.b16 %v476
        %v621 = vunpack.c.l.b16 %v477
        %v622 = vunpack.c.l.b16 %v478
        %v623 = vunpack.c.l.b16 %v479
        %v624 = vunpack.c.l.b16 %v480
        %v625 = vunpack.c.l.b16 %v481
        %v626 = vunpack.c.l.b16 %v482
        %v627 = vunpack.c.l.b16 %v483
        %v628 = vunpack.c.l.b16 %v484
        %v629 = vunpack.c.l.b16 %v485
        %v630 = vunpack.c.l.b16 %v486
        %v631 = vunpack.c.l.b16 %v487
        %v632 = vunpack.c.l.b16 %v488
        %v633 = vunpack.c.l.b16 %v489
        %v634 = vunpack.c.l.b16 %v490
        %v635 = vunpack.c.l.b16 %v491
        %v636 = vunpack.c.l.b16 %v492
        %v637 = vunpack.c.l.b16 %v493
        %v638 = vunpack.c.l.b16 %v494
        %v639 = vunpack.c.l.b16 %v495
        %v640 = vunpack.c.l.b16 %v496
        %v641 = vunpack.c.l.b16 %v497
        %v642 = vunpack.c.l.b16 %v498
        %v643 = vunpack.c.l.b16 %v499
        %v644 = vunpack.c.l.b16 %v500
        %v645 = vunpack.c.l.b16 %v501
        %v646 = vunpack.c.l.b16 %v502
        %v647 = vunpack.c.l.b16 %v503
        %v648 = vpack.c.b16 %v617, %v616
        %v649 = vpack.c.b16 %v619, %v618
        %v650 = vpack.c.b16 %v621, %v620
        %v651 = vpack.c.b16 %v623, %v622
        %v652 = vpack.c.b16 %v625, %v624
        %v653 = vpack.c.b16 %v627, %v626
        %v654 = vpack.c.b16 %v629, %v628
        %v655 = vpack.c.b16 %v631, %v630
        %v656 = vpack.c.b16 %v633, %v632
        %v657 = vpack.c.b16 %v635, %v634
        %v658 = vpack.c.b16 %v637, %v636
        %v659 = vpack.c.b16 %v639, %v638
        %v660 = vpack.c.b16 %v641, %v640
        %v661 = vpack.c.b16 %v643, %v642
        %v662 = vpack.c.b16 %v645, %v644
        %v663 = vpack.c.b16 %v647, %v646
        %680 = vmatprep.subr.bf16.mxu0 0
        %681 = vmatpush1.bf16.msra.mxu0 %v648
        %682 = vmatprep.subr.bf16.mxu0 0
        %683 = vmatpush1.bf16.msra.mxu0 %v649
        %684 = vmatprep.subr.bf16.mxu0 0
        %685 = vmatpush1.bf16.msra.mxu0 %v650
        %686 = vmatprep.subr.bf16.mxu0 0
        %687 = vmatpush1.bf16.msra.mxu0 %v651
        %688 = vmatprep.subr.bf16.mxu0 0
        %689 = vmatpush1.bf16.msra.mxu0 %v652
        %690 = vmatprep.subr.bf16.mxu0 0
        %691 = vmatpush1.bf16.msra.mxu0 %v653
        %692 = vmatprep.subr.bf16.mxu0 0
        %693 = vmatpush1.bf16.msra.mxu0 %v654
        %694 = vmatprep.subr.bf16.mxu0 0
        %695 = vmatpush1.bf16.msra.mxu0 %v655
        %696 = vmatprep.subr.bf16.mxu0 0
        %697 = vmatpush1.bf16.msra.mxu0 %v656
        %698 = vmatprep.subr.bf16.mxu0 0
        %699 = vmatpush1.bf16.msra.mxu0 %v657
        %700 = vmatprep.subr.bf16.mxu0 0
        %701 = vmatpush1.bf16.msra.mxu0 %v658
        %702 = vmatprep.subr.bf16.mxu0 0
        %703 = vmatpush1.bf16.msra.mxu0 %v659
        %704 = vmatprep.subr.bf16.mxu0 0
        %705 = vmatpush1.bf16.msra.mxu0 %v660
        %706 = vmatprep.subr.bf16.mxu0 0
        %707 = vmatpush1.bf16.msra.mxu0 %v661
        %708 = vmatprep.subr.bf16.mxu0 0
        %709 = vmatpush1.bf16.msra.mxu0 %v662
        %710 = vmatprep.subr.bf16.mxu0 0
        %711 = vmatpush1.bf16.msra.mxu0 %v663
        %712 = vmatprep.mubr.bf16.mxu0 %v553
        %713 = vmatmul.mubr.bf16.gmra.mrb[0].mxu0 %v552
        %v714 = vpop.f32.mrb[0].mxu0
        %v715 = vadd.f32 0.0, %v714
        %v716 = vpop.f32.mrb[0].mxu0
        %v717 = vpop.f32.mrb[0].mxu0
        %v718 = vadd.f32 0.0, %v717
        %v719 = vpop.f32.mrb[0].mxu0
        %720 = vmatprep.mubr.bf16.mxu0 %v555
        %721 = vmatmul.mubr.bf16.gmra.mrb[0].mxu0 %v554
        %v722 = vpop.f32.mrb[0].mxu0
        %v723 = vadd.f32 0.0, %v722
        %v724 = vpop.f32.mrb[0].mxu0
        %v725 = vpop.f32.mrb[0].mxu0
        %v726 = vadd.f32 0.0, %v725
        %v727 = vpop.f32.mrb[0].mxu0
        %728 = vmatprep.mubr.bf16.mxu0 %v557
        %729 = vmatmul.mubr.bf16.gmra.mrb[0].mxu0 %v556
        %v730 = vpop.f32.mrb[0].mxu0
        %v731 = vadd.f32 0.0, %v730
        %v732 = vpop.f32.mrb[0].mxu0
        %v733 = vpop.f32.mrb[0].mxu0
        %v734 = vadd.f32 0.0, %v733
        %v735 = vpop.f32.mrb[0].mxu0
        %736 = vmatprep.mubr.bf16.mxu0 %v559
        %737 = vmatmul.mubr.bf16.gmra.mrb[0].mxu0 %v558
        %v738 = vpop.f32.mrb[0].mxu0
        %v739 = vadd.f32 0.0, %v738
        %v740 = vpop.f32.mrb[0].mxu0
        %v741 = vpop.f32.mrb[0].mxu0
        %v742 = vadd.f32 0.0, %v741
        %v743 = vpop.f32.mrb[0].mxu0
        %744 = vmatprep.mubr.bf16.mxu0 %v561
        %745 = vmatmul.mubr.bf16.gmra.mrb[0].mxu0 %v560
        %v746 = vpop.f32.mrb[0].mxu0
        %v747 = vadd.f32 0.0, %v746
        %v748 = vpop.f32.mrb[0].mxu0
        %v749 = vpop.f32.mrb[0].mxu0
        %v750 = vadd.f32 0.0, %v749
        %v751 = vpop.f32.mrb[0].mxu0
        %752 = vmatprep.mubr.bf16.mxu0 %v563
        %753 = vmatmul.mubr.bf16.gmra.mrb[0].mxu0 %v562
        %v754 = vpop.f32.mrb[0].mxu0
        %v755 = vadd.f32 0.0, %v754
        %v756 = vpop.f32.mrb[0].mxu0
        %v757 = vpop.f32.mrb[0].mxu0
        %v758 = vadd.f32 0.0, %v757
        %v759 = vpop.f32.mrb[0].mxu0
        %760 = vmatprep.mubr.bf16.mxu0 %v565
        %761 = vmatmul.mubr.bf16.gmra.mrb[0].mxu0 %v564
        %v762 = vpop.f32.mrb[0].mxu0
        %v763 = vadd.f32 0.0, %v762
        %v764 = vpop.f32.mrb[0].mxu0
        %v765 = vpop.f32.mrb[0].mxu0
        %v766 = vadd.f32 0.0, %v765
        %v767 = vpop.f32.mrb[0].mxu0
        %768 = vmatprep.mubr.bf16.mxu0 %v567
        %769 = vmatmul.mubr.bf16.gmra.mrb[0].mxu0 %v566
        %v770 = vpop.f32.mrb[0].mxu0
        %v771 = vadd.f32 0.0, %v770
        %v772 = vpop.f32.mrb[0].mxu0
        %v773 = vpop.f32.mrb[0].mxu0
        %v774 = vadd.f32 0.0, %v773
        %v775 = vpop.f32.mrb[0].mxu0
        %776 = vdwg.mxu0
        %v793 = vunpack.c.l.b16 %v456
        %v794 = vunpack.c.h.b16 %v456
        %v795 = vunpack.c.l.b16 %v457
        %v796 = vunpack.c.h.b16 %v457
        %v797 = vunpack.c.l.b16 %v458
        %v798 = vunpack.c.h.b16 %v458
        %v799 = vunpack.c.l.b16 %v459
        %v800 = vunpack.c.h.b16 %v459
        %v801 = vunpack.c.l.b16 %v460
        %v802 = vunpack.c.h.b16 %v460
        %v803 = vunpack.c.l.b16 %v461
        %v804 = vunpack.c.h.b16 %v461
        %v805 = vunpack.c.l.b16 %v462
        %v806 = vunpack.c.h.b16 %v462
        %v807 = vunpack.c.l.b16 %v463
        %v808 = vunpack.c.h.b16 %v463
        %v809 = vunpack.c.l.b16 %v464
        %v810 = vunpack.c.h.b16 %v464
        %v811 = vunpack.c.l.b16 %v465
        %v812 = vunpack.c.h.b16 %v465
        %v813 = vunpack.c.l.b16 %v466
        %v814 = vunpack.c.h.b16 %v466
        %v815 = vunpack.c.l.b16 %v467
        %v816 = vunpack.c.h.b16 %v467
        %v817 = vunpack.c.l.b16 %v468
        %v818 = vunpack.c.h.b16 %v468
        %v819 = vunpack.c.l.b16 %v469
        %v820 = vunpack.c.h.b16 %v469
        %v821 = vunpack.c.l.b16 %v470
        %v822 = vunpack.c.h.b16 %v470
        %v823 = vunpack.c.l.b16 %v471
        %v824 = vunpack.c.h.b16 %v471
        %v825 = vpack.c.b16 %v795, %v793
        %v826 = vpack.c.b16 %v796, %v794
        %v827 = vpack.c.b16 %v799, %v797
        %v828 = vpack.c.b16 %v800, %v798
        %v829 = vpack.c.b16 %v803, %v801
        %v830 = vpack.c.b16 %v804, %v802
        %v831 = vpack.c.b16 %v807, %v805
        %v832 = vpack.c.b16 %v808, %v806
        %v833 = vpack.c.b16 %v811, %v809
        %v834 = vpack.c.b16 %v812, %v810
        %v835 = vpack.c.b16 %v815, %v813
        %v836 = vpack.c.b16 %v816, %v814
        %v837 = vpack.c.b16 %v819, %v817
        %v838 = vpack.c.b16 %v820, %v818
        %v839 = vpack.c.b16 %v823, %v821
        %v840 = vpack.c.b16 %v824, %v822
        %857 = vmatprep.subr.bf16.mxu0 0
        %858 = vmatpush1.bf16.msra.mxu0 %v648
        %859 = vmatprep.subr.bf16.mxu0 0
        %860 = vmatpush1.bf16.msra.mxu0 %v649
        %861 = vmatprep.subr.bf16.mxu0 0
        %862 = vmatpush1.bf16.msra.mxu0 %v650
        %863 = vmatprep.subr.bf16.mxu0 0
        %864 = vmatpush1.bf16.msra.mxu0 %v651
        %865 = vmatprep.subr.bf16.mxu0 0
        %866 = vmatpush1.bf16.msra.mxu0 %v652
        %867 = vmatprep.subr.bf16.mxu0 0
        %868 = vmatpush1.bf16.msra.mxu0 %v653
        %869 = vmatprep.subr.bf16.mxu0 0
        %870 = vmatpush1.bf16.msra.mxu0 %v654
        %871 = vmatprep.subr.bf16.mxu0 0
        %872 = vmatpush1.bf16.msra.mxu0 %v655
        %873 = vmatprep.subr.bf16.mxu0 0
        %874 = vmatpush1.bf16.msra.mxu0 %v656
        %875 = vmatprep.subr.bf16.mxu0 0
        %876 = vmatpush1.bf16.msra.mxu0 %v657
        %877 = vmatprep.subr.bf16.mxu0 0
        %878 = vmatpush1.bf16.msra.mxu0 %v658
        %879 = vmatprep.subr.bf16.mxu0 0
        %880 = vmatpush1.bf16.msra.mxu0 %v659
        %881 = vmatprep.subr.bf16.mxu0 0
        %882 = vmatpush1.bf16.msra.mxu0 %v660
        %883 = vmatprep.subr.bf16.mxu0 0
        %884 = vmatpush1.bf16.msra.mxu0 %v661
        %885 = vmatprep.subr.bf16.mxu0 0
        %886 = vmatpush1.bf16.msra.mxu0 %v662
        %887 = vmatprep.subr.bf16.mxu0 0
        %888 = vmatpush1.bf16.msra.mxu0 %v663
        %889 = vmatprep.mubr.bf16.mxu0 %v826
        %890 = vmatmul.mubr.bf16.gmra.mrb[0].mxu0 %v825
        %v891 = vpop.f32.mrb[0].mxu0
        %v892 = vadd.f32 0.0, %v891
        %v893 = vpop.f32.mrb[0].mxu0
        %v894 = vpop.f32.mrb[0].mxu0
        %v895 = vadd.f32 0.0, %v894
        %v896 = vpop.f32.mrb[0].mxu0
        %897 = vmatprep.mubr.bf16.mxu0 %v828
        %898 = vmatmul.mubr.bf16.gmra.mrb[0].mxu0 %v827
        %v899 = vpop.f32.mrb[0].mxu0
        %v900 = vadd.f32 0.0, %v899
        %v901 = vpop.f32.mrb[0].mxu0
        %v902 = vpop.f32.mrb[0].mxu0
        %v903 = vadd.f32 0.0, %v902
        %v904 = vpop.f32.mrb[0].mxu0
        %905 = vmatprep.mubr.bf16.mxu0 %v830
        %906 = vmatmul.mubr.bf16.gmra.mrb[0].mxu0 %v829
        %v907 = vpop.f32.mrb[0].mxu0
        %v908 = vadd.f32 0.0, %v907
        %v909 = vpop.f32.mrb[0].mxu0
        %v910 = vpop.f32.mrb[0].mxu0
        %v911 = vadd.f32 0.0, %v910
        %v912 = vpop.f32.mrb[0].mxu0
        %913 = vmatprep.mubr.bf16.mxu0 %v832
        %914 = vmatmul.mubr.bf16.gmra.mrb[0].mxu0 %v831
        %v915 = vpop.f32.mrb[0].mxu0
        %v916 = vadd.f32 0.0, %v915
        %v917 = vpop.f32.mrb[0].mxu0
        %v918 = vpop.f32.mrb[0].mxu0
        %v919 = vadd.f32 0.0, %v918
        %v920 = vpop.f32.mrb[0].mxu0
        %921 = vmatprep.mubr.bf16.mxu0 %v834
        %922 = vmatmul.mubr.bf16.gmra.mrb[0].mxu0 %v833
        %v923 = vpop.f32.mrb[0].mxu0
        %v924 = vadd.f32 0.0, %v923
        %v925 = vpop.f32.mrb[0].mxu0
        %v926 = vpop.f32.mrb[0].mxu0
        %v927 = vadd.f32 0.0, %v926
        %v928 = vpop.f32.mrb[0].mxu0
        %929 = vmatprep.mubr.bf16.mxu0 %v836
        %930 = vmatmul.mubr.bf16.gmra.mrb[0].mxu0 %v835
        %v931 = vpop.f32.mrb[0].mxu0
        %v932 = vadd.f32 0.0, %v931
        %v933 = vpop.f32.mrb[0].mxu0
        %v934 = vpop.f32.mrb[0].mxu0
        %v935 = vadd.f32 0.0, %v934
        %v936 = vpop.f32.mrb[0].mxu0
        %937 = vmatprep.mubr.bf16.mxu0 %v838
        %938 = vmatmul.mubr.bf16.gmra.mrb[0].mxu0 %v837
        %v939 = vpop.f32.mrb[0].mxu0
        %v940 = vadd.f32 0.0, %v939
        %v941 = vpop.f32.mrb[0].mxu0
        %v942 = vpop.f32.mrb[0].mxu0
        %v943 = vadd.f32 0.0, %v942
        %v944 = vpop.f32.mrb[0].mxu0
        %945 = vmatprep.mubr.bf16.mxu0 %v840
        %946 = vmatmul.mubr.bf16.gmra.mrb[0].mxu0 %v839
        %v947 = vpop.f32.mrb[0].mxu0
        %v948 = vadd.f32 0.0, %v947
        %v949 = vpop.f32.mrb[0].mxu0
        %v950 = vpop.f32.mrb[0].mxu0
        %v951 = vadd.f32 0.0, %v950
        %v952 = vpop.f32.mrb[0].mxu0
        %953 = vdwg.mxu0
        %v954 = vunpack.c.l.bf16 %v440
        %v955 = vunpack.c.h.bf16 %v440
        %v956 = vunpack.c.l.bf16 %v441
        %v957 = vunpack.c.h.bf16 %v441
        %v958 = vunpack.c.l.bf16 %v442
        %v959 = vunpack.c.h.bf16 %v442
        %v960 = vunpack.c.l.bf16 %v443
        %v961 = vunpack.c.h.bf16 %v443
        %v962 = vunpack.c.l.bf16 %v444
        %v963 = vunpack.c.h.bf16 %v444
        %v964 = vunpack.c.l.bf16 %v445
        %v965 = vunpack.c.h.bf16 %v445
        %v966 = vunpack.c.l.bf16 %v446
        %v967 = vunpack.c.h.bf16 %v446
        %v968 = vunpack.c.l.bf16 %v447
        %v969 = vunpack.c.h.bf16 %v447
        %v970 = vunpack.c.l.bf16 %v448
        %v971 = vunpack.c.h.bf16 %v448
        %v972 = vunpack.c.l.bf16 %v449
        %v973 = vunpack.c.h.bf16 %v449
        %v974 = vunpack.c.l.bf16 %v450
        %v975 = vunpack.c.h.bf16 %v450
        %v976 = vunpack.c.l.bf16 %v451
        %v977 = vunpack.c.h.bf16 %v451
        %v978 = vunpack.c.l.bf16 %v452
        %v979 = vunpack.c.h.bf16 %v452
        %v980 = vunpack.c.l.bf16 %v453
        %v981 = vunpack.c.h.bf16 %v453
        %v982 = vunpack.c.l.bf16 %v454
        %v983 = vunpack.c.h.bf16 %v454
        %v984 = vunpack.c.l.bf16 %v455
        %v985 = vunpack.c.h.bf16 %v455
        %v986 = vadd.f32 %v954, %v955
        %987 = vadd.xlane.f32.xlu0 %v986
        %v988 = vpop.xlane.xlu0 %987
        %v989 = vadd.f32 %v956, %v957
        %990 = vadd.xlane.f32.xlu0 %v989
        %v991 = vpop.xlane.xlu0 %990
        %v992 = vadd.f32 %v958, %v959
        %993 = vadd.xlane.f32.xlu0 %v992
        %v994 = vpop.xlane.xlu0 %993
        %v995 = vadd.f32 %v960, %v961
        %996 = vadd.xlane.f32.xlu0 %v995
        %v997 = vpop.xlane.xlu0 %996
        %v998 = vadd.f32 %v962, %v963
        %999 = vadd.xlane.f32.xlu0 %v998
        %v1000 = vpop.xlane.xlu0 %999
        %v1001 = vadd.f32 %v964, %v965
        %1002 = vadd.xlane.f32.xlu0 %v1001
        %v1003 = vpop.xlane.xlu0 %1002
        %v1004 = vadd.f32 %v966, %v967
        %1005 = vadd.xlane.f32.xlu0 %v1004
        %v1006 = vpop.xlane.xlu0 %1005
        %v1007 = vadd.f32 %v968, %v969
        %1008 = vadd.xlane.f32.xlu0 %v1007
        %v1009 = vpop.xlane.xlu0 %1008
        %v1010 = vadd.f32 %v970, %v971
        %1011 = vadd.xlane.f32.xlu0 %v1010
        %v1012 = vpop.xlane.xlu0 %1011
        %v1013 = vadd.f32 %v972, %v973
        %1014 = vadd.xlane.f32.xlu0 %v1013
        %v1015 = vpop.xlane.xlu0 %1014
        %v1016 = vadd.f32 %v974, %v975
        %1017 = vadd.xlane.f32.xlu0 %v1016
        %v1018 = vpop.xlane.xlu0 %1017
        %v1019 = vadd.f32 %v976, %v977
        %1020 = vadd.xlane.f32.xlu0 %v1019
        %v1021 = vpop.xlane.xlu0 %1020
        %v1022 = vadd.f32 %v978, %v979
        %1023 = vadd.xlane.f32.xlu0 %v1022
        %v1024 = vpop.xlane.xlu0 %1023
        %v1025 = vadd.f32 %v980, %v981
        %1026 = vadd.xlane.f32.xlu0 %v1025
        %v1027 = vpop.xlane.xlu0 %1026
        %v1028 = vadd.f32 %v982, %v983
        %1029 = vadd.xlane.f32.xlu0 %v1028
        %v1030 = vpop.xlane.xlu0 %1029
        %v1031 = vadd.f32 %v984, %v985
        %1032 = vadd.xlane.f32.xlu0 %v1031
        %v1033 = vpop.xlane.xlu0 %1032
        %v1034 = vunpack.c.l.bf16 %v456
        %v1035 = vunpack.c.h.bf16 %v456
        %v1036 = vunpack.c.l.bf16 %v457
        %v1037 = vunpack.c.h.bf16 %v457
        %v1038 = vunpack.c.l.bf16 %v458
        %v1039 = vunpack.c.h.bf16 %v458
        %v1040 = vunpack.c.l.bf16 %v459
        %v1041 = vunpack.c.h.bf16 %v459
        %v1042 = vunpack.c.l.bf16 %v460
        %v1043 = vunpack.c.h.bf16 %v460
        %v1044 = vunpack.c.l.bf16 %v461
        %v1045 = vunpack.c.h.bf16 %v461
        %v1046 = vunpack.c.l.bf16 %v462
        %v1047 = vunpack.c.h.bf16 %v462
        %v1048 = vunpack.c.l.bf16 %v463
        %v1049 = vunpack.c.h.bf16 %v463
        %v1050 = vunpack.c.l.bf16 %v464
        %v1051 = vunpack.c.h.bf16 %v464
        %v1052 = vunpack.c.l.bf16 %v465
        %v1053 = vunpack.c.h.bf16 %v465
        %v1054 = vunpack.c.l.bf16 %v466
        %v1055 = vunpack.c.h.bf16 %v466
        %v1056 = vunpack.c.l.bf16 %v467
        %v1057 = vunpack.c.h.bf16 %v467
        %v1058 = vunpack.c.l.bf16 %v468
        %v1059 = vunpack.c.h.bf16 %v468
        %v1060 = vunpack.c.l.bf16 %v469
        %v1061 = vunpack.c.h.bf16 %v469
        %v1062 = vunpack.c.l.bf16 %v470
        %v1063 = vunpack.c.h.bf16 %v470
        %v1064 = vunpack.c.l.bf16 %v471
        %v1065 = vunpack.c.h.bf16 %v471
        %v1066 = vadd.f32 %v1034, %v1035
        %1067 = vadd.xlane.f32.xlu0 %v1066
        %v1068 = vpop.xlane.xlu0 %1067
        %v1069 = vadd.f32 %v1036, %v1037
        %1070 = vadd.xlane.f32.xlu0 %v1069
        %v1071 = vpop.xlane.xlu0 %1070
        %v1072 = vadd.f32 %v1038, %v1039
        %1073 = vadd.xlane.f32.xlu0 %v1072
        %v1074 = vpop.xlane.xlu0 %1073
        %v1075 = vadd.f32 %v1040, %v1041
        %1076 = vadd.xlane.f32.xlu0 %v1075
        %v1077 = vpop.xlane.xlu0 %1076
        %v1078 = vadd.f32 %v1042, %v1043
        %1079 = vadd.xlane.f32.xlu0 %v1078
        %v1080 = vpop.xlane.xlu0 %1079
        %v1081 = vadd.f32 %v1044, %v1045
        %1082 = vadd.xlane.f32.xlu0 %v1081
        %v1083 = vpop.xlane.xlu0 %1082
        %v1084 = vadd.f32 %v1046, %v1047
        %1085 = vadd.xlane.f32.xlu0 %v1084
        %v1086 = vpop.xlane.xlu0 %1085
        %v1087 = vadd.f32 %v1048, %v1049
        %1088 = vadd.xlane.f32.xlu0 %v1087
        %v1089 = vpop.xlane.xlu0 %1088
        %v1090 = vadd.f32 %v1050, %v1051
        %1091 = vadd.xlane.f32.xlu0 %v1090
        %v1092 = vpop.xlane.xlu0 %1091
        %v1093 = vadd.f32 %v1052, %v1053
        %1094 = vadd.xlane.f32.xlu0 %v1093
        %v1095 = vpop.xlane.xlu0 %1094
        %v1096 = vadd.f32 %v1054, %v1055
        %1097 = vadd.xlane.f32.xlu0 %v1096
        %v1098 = vpop.xlane.xlu0 %1097
        %v1099 = vadd.f32 %v1056, %v1057
        %1100 = vadd.xlane.f32.xlu0 %v1099
        %v1101 = vpop.xlane.xlu0 %1100
        %v1102 = vadd.f32 %v1058, %v1059
        %1103 = vadd.xlane.f32.xlu0 %v1102
        %v1104 = vpop.xlane.xlu0 %1103
        %v1105 = vadd.f32 %v1060, %v1061
        %1106 = vadd.xlane.f32.xlu0 %v1105
        %v1107 = vpop.xlane.xlu0 %1106
        %v1108 = vadd.f32 %v1062, %v1063
        %1109 = vadd.xlane.f32.xlu0 %v1108
        %v1110 = vpop.xlane.xlu0 %1109
        %v1111 = vadd.f32 %v1064, %v1065
        %1112 = vadd.xlane.f32.xlu0 %v1111
        %v1113 = vpop.xlane.xlu0 %1112
        %v1114 = vpack.c.bf16 %v718, %v715
        %v1115 = vpack.c.bf16 %v895, %v892
        %v1116 = vpack.c.bf16 %v726, %v723
        %v1117 = vpack.c.bf16 %v903, %v900
        %v1118 = vpack.c.bf16 %v734, %v731
        %v1119 = vpack.c.bf16 %v911, %v908
        %v1120 = vpack.c.bf16 %v742, %v739
        %v1121 = vpack.c.bf16 %v919, %v916
        %v1122 = vpack.c.bf16 %v750, %v747
        %v1123 = vpack.c.bf16 %v927, %v924
        %v1124 = vpack.c.bf16 %v758, %v755
        %v1125 = vpack.c.bf16 %v935, %v932
        %v1126 = vpack.c.bf16 %v766, %v763
        %v1127 = vpack.c.bf16 %v943, %v940
        %v1128 = vpack.c.bf16 %v774, %v771
        %v1129 = vpack.c.bf16 %v951, %v948
        %v1130 = vld [vmem:[#allocation8] sm:$0xff]
        %v1131 = vld [vmem:[#allocation8 + $0x8] sm:$0xf]
        %v1132 = vld [vmem:[#allocation8 + $0xc] sm:$0xff]
        %v1133 = vld [vmem:[#allocation8 + $0x14] sm:$0xf]
        %v1134 = vld [vmem:[#allocation8 + $0x18] sm:$0xff]
        %v1135 = vld [vmem:[#allocation8 + $0x20] sm:$0xf]
        %v1136 = vld [vmem:[#allocation8 + $0x24] sm:$0xff]
        %v1137 = vld [vmem:[#allocation8 + $0x2c] sm:$0xf]
        %v1138 = vld [vmem:[#allocation8 + $0x30] sm:$0xff]
        %v1139 = vld [vmem:[#allocation8 + $0x38] sm:$0xf]
        %v1140 = vld [vmem:[#allocation8 + $0x3c] sm:$0xff]
        %v1141 = vld [vmem:[#allocation8 + $0x44] sm:$0xf]
        %v1142 = vld [vmem:[#allocation8 + $0x48] sm:$0xff]
        %v1143 = vld [vmem:[#allocation8 + $0x50] sm:$0xf]
        %v1144 = vld [vmem:[#allocation8 + $0x54] sm:$0xff]
        %v1145 = vld [vmem:[#allocation8 + $0x5c] sm:$0xf]
        %v1146 = vld [vmem:[#allocation8 + $0x60] sm:$0xff]
        %v1147 = vld [vmem:[#allocation8 + $0x68] sm:$0xf]
        %v1148 = vld [vmem:[#allocation8 + $0x6c] sm:$0xff]
        %v1149 = vld [vmem:[#allocation8 + $0x74] sm:$0xf]
        %v1150 = vld [vmem:[#allocation8 + $0x78] sm:$0xff]
        %v1151 = vld [vmem:[#allocation8 + $0x80] sm:$0xf]
        %v1152 = vld [vmem:[#allocation8 + $0x84] sm:$0xff]
        %v1153 = vld [vmem:[#allocation8 + $0x8c] sm:$0xf]
        %v1154 = vld [vmem:[#allocation8 + $0x90] sm:$0xff]
        %v1155 = vld [vmem:[#allocation8 + $0x98] sm:$0xf]
        %v1156 = vld [vmem:[#allocation8 + $0x9c] sm:$0xff]
        %v1157 = vld [vmem:[#allocation8 + $0xa4] sm:$0xf]
        %v1158 = vld [vmem:[#allocation8 + $0xa8] sm:$0xff]
        %v1159 = vld [vmem:[#allocation8 + $0xb0] sm:$0xf]
        %v1160 = vld [vmem:[#allocation8 + $0xb4] sm:$0xff]
        %v1161 = vld [vmem:[#allocation8 + $0xbc] sm:$0xf]
        %v1162 = vld [vmem:[#allocation8 + $0xc0] sm:$0xff]
        %v1163 = vld [vmem:[#allocation8 + $0xc8] sm:$0xf]
        %v1164 = vld [vmem:[#allocation8 + $0xcc] sm:$0xff]
        %v1165 = vld [vmem:[#allocation8 + $0xd4] sm:$0xf]
        %v1166 = vld [vmem:[#allocation8 + $0xd8] sm:$0xff]
        %v1167 = vld [vmem:[#allocation8 + $0xe0] sm:$0xf]
        %v1168 = vld [vmem:[#allocation8 + $0xe4] sm:$0xff]
        %v1169 = vld [vmem:[#allocation8 + $0xec] sm:$0xf]
        %v1170 = vld [vmem:[#allocation8 + $0xf0] sm:$0xff]
        %v1171 = vld [vmem:[#allocation8 + $0xf8] sm:$0xf]
        %v1172 = vld [vmem:[#allocation8 + $0xfc] sm:$0xff]
        %v1173 = vld [vmem:[#allocation8 + $0x104] sm:$0xf]
        %v1174 = vld [vmem:[#allocation8 + $0x108] sm:$0xff]
        %v1175 = vld [vmem:[#allocation8 + $0x110] sm:$0xf]
        %v1176 = vld [vmem:[#allocation8 + $0x114] sm:$0xff]
        %v1177 = vld [vmem:[#allocation8 + $0x11c] sm:$0xf]
        %v1178 = vld [vmem:[#allocation8 + $0x120] sm:$0xff]
        %v1179 = vld [vmem:[#allocation8 + $0x128] sm:$0xf]
        %v1180 = vld [vmem:[#allocation8 + $0x12c] sm:$0xff]
        %v1181 = vld [vmem:[#allocation8 + $0x134] sm:$0xf]
        %v1182 = vld [vmem:[#allocation8 + $0x138] sm:$0xff]
        %v1183 = vld [vmem:[#allocation8 + $0x140] sm:$0xf]
        %v1184 = vld [vmem:[#allocation8 + $0x144] sm:$0xff]
        %v1185 = vld [vmem:[#allocation8 + $0x14c] sm:$0xf]
        %v1186 = vld [vmem:[#allocation8 + $0x150] sm:$0xff]
        %v1187 = vld [vmem:[#allocation8 + $0x158] sm:$0xf]
        %v1188 = vld [vmem:[#allocation8 + $0x15c] sm:$0xff]
        %v1189 = vld [vmem:[#allocation8 + $0x164] sm:$0xf]
        %v1190 = vld [vmem:[#allocation8 + $0x168] sm:$0xff]
        %v1191 = vld [vmem:[#allocation8 + $0x170] sm:$0xf]
        %v1192 = vld [vmem:[#allocation8 + $0x174] sm:$0xff]
        %v1193 = vld [vmem:[#allocation8 + $0x17c] sm:$0xf]
        %v1194 = vld [vmem:[%s5] sm:$0x7]
        %v1196 = vlaneseq
        %v1197 = vshrl.u32 %v1196, 7
        %v1198 = vsub.s32 0, %v1197
        %v1199 = vrot.slane %v1194, %v1198
        %v1200 = vlaneseq
        %v1201 = vshrl.u32 %v1200, 7
        %v1202 = vsub.s32 1, %v1201
        %v1203 = vrot.slane %v1194, %v1202
        %v1204 = vlaneseq
        %v1205 = vshrl.u32 %v1204, 7
        %v1206 = vsub.s32 2, %v1205
        %v1207 = vrot.slane %v1194, %v1206
        %v1211 = vmul.f32 %v988, %v1199
        %v1212 = vmul.f32 %v988, %v1203
        %v1213 = vmul.f32 %v988, %v1207
        %v1214 = vmul.f32 %v991, %v1199
        %v1215 = vmul.f32 %v991, %v1203
        %v1216 = vmul.f32 %v991, %v1207
        %v1217 = vmul.f32 %v994, %v1199
        %v1218 = vmul.f32 %v994, %v1203
        %v1219 = vmul.f32 %v994, %v1207
        %v1220 = vmul.f32 %v997, %v1199
        %v1221 = vmul.f32 %v997, %v1203
        %v1222 = vmul.f32 %v997, %v1207
        %v1223 = vmul.f32 %v1000, %v1199
        %v1224 = vmul.f32 %v1000, %v1203
        %v1225 = vmul.f32 %v1000, %v1207
        %v1226 = vmul.f32 %v1003, %v1199
        %v1227 = vmul.f32 %v1003, %v1203
        %v1228 = vmul.f32 %v1003, %v1207
        %v1229 = vmul.f32 %v1006, %v1199
        %v1230 = vmul.f32 %v1006, %v1203
        %v1231 = vmul.f32 %v1006, %v1207
        %v1232 = vmul.f32 %v1009, %v1199
        %v1233 = vmul.f32 %v1009, %v1203
        %v1234 = vmul.f32 %v1009, %v1207
        %v1235 = vmul.f32 %v1012, %v1199
        %v1236 = vmul.f32 %v1012, %v1203
        %v1237 = vmul.f32 %v1012, %v1207
        %v1238 = vmul.f32 %v1015, %v1199
        %v1239 = vmul.f32 %v1015, %v1203
        %v1240 = vmul.f32 %v1015, %v1207
        %v1241 = vmul.f32 %v1018, %v1199
        %v1242 = vmul.f32 %v1018, %v1203
        %v1243 = vmul.f32 %v1018, %v1207
        %v1244 = vmul.f32 %v1021, %v1199
        %v1245 = vmul.f32 %v1021, %v1203
        %v1246 = vmul.f32 %v1021, %v1207
        %v1247 = vmul.f32 %v1024, %v1199
        %v1248 = vmul.f32 %v1024, %v1203
        %v1249 = vmul.f32 %v1024, %v1207
        %v1250 = vmul.f32 %v1027, %v1199
        %v1251 = vmul.f32 %v1027, %v1203
        %v1252 = vmul.f32 %v1027, %v1207
        %v1253 = vmul.f32 %v1030, %v1199
        %v1254 = vmul.f32 %v1030, %v1203
        %v1255 = vmul.f32 %v1030, %v1207
        %v1256 = vmul.f32 %v1033, %v1199
        %v1257 = vmul.f32 %v1033, %v1203
        %v1258 = vmul.f32 %v1033, %v1207
        %v1323 = vunpack.c.l.b16 %v1130
        %v1324 = vunpack.c.h.b16 %v1130
        %v1325 = vunpack.c.l.b16 %v1131
        %v1326 = vunpack.c.l.b16 %v1132
        %v1327 = vunpack.c.h.b16 %v1132
        %v1328 = vunpack.c.l.b16 %v1133
        %v1329 = vunpack.c.l.b16 %v1134
        %v1330 = vunpack.c.h.b16 %v1134
        %v1331 = vunpack.c.l.b16 %v1135
        %v1332 = vunpack.c.l.b16 %v1136
        %v1333 = vunpack.c.h.b16 %v1136
        %v1334 = vunpack.c.l.b16 %v1137
        %v1335 = vunpack.c.l.b16 %v1138
        %v1336 = vunpack.c.h.b16 %v1138
        %v1337 = vunpack.c.l.b16 %v1139
        %v1338 = vunpack.c.l.b16 %v1140
        %v1339 = vunpack.c.h.b16 %v1140
        %v1340 = vunpack.c.l.b16 %v1141
        %v1341 = vunpack.c.l.b16 %v1142
        %v1342 = vunpack.c.h.b16 %v1142
        %v1343 = vunpack.c.l.b16 %v1143
        %v1344 = vunpack.c.l.b16 %v1144
        %v1345 = vunpack.c.h.b16 %v1144
        %v1346 = vunpack.c.l.b16 %v1145
        %v1347 = vunpack.c.l.b16 %v1146
        %v1348 = vunpack.c.h.b16 %v1146
        %v1349 = vunpack.c.l.b16 %v1147
        %v1350 = vunpack.c.l.b16 %v1148
        %v1351 = vunpack.c.h.b16 %v1148
        %v1352 = vunpack.c.l.b16 %v1149
        %v1353 = vunpack.c.l.b16 %v1150
        %v1354 = vunpack.c.h.b16 %v1150
        %v1355 = vunpack.c.l.b16 %v1151
        %v1356 = vunpack.c.l.b16 %v1152
        %v1357 = vunpack.c.h.b16 %v1152
        %v1358 = vunpack.c.l.b16 %v1153
        %v1359 = vunpack.c.l.b16 %v1154
        %v1360 = vunpack.c.h.b16 %v1154
        %v1361 = vunpack.c.l.b16 %v1155
        %v1362 = vunpack.c.l.b16 %v1156
        %v1363 = vunpack.c.h.b16 %v1156
        %v1364 = vunpack.c.l.b16 %v1157
        %v1365 = vunpack.c.l.b16 %v1158
        %v1366 = vunpack.c.h.b16 %v1158
        %v1367 = vunpack.c.l.b16 %v1159
        %v1368 = vunpack.c.l.b16 %v1160
        %v1369 = vunpack.c.h.b16 %v1160
        %v1370 = vunpack.c.l.b16 %v1161
        %v1371 = vunpack.c.l.b16 %v1162
        %v1372 = vunpack.c.h.b16 %v1162
        %v1373 = vunpack.c.l.b16 %v1163
        %v1374 = vunpack.c.l.b16 %v1164
        %v1375 = vunpack.c.h.b16 %v1164
        %v1376 = vunpack.c.l.b16 %v1165
        %v1377 = vunpack.c.l.b16 %v1166
        %v1378 = vunpack.c.h.b16 %v1166
        %v1379 = vunpack.c.l.b16 %v1167
        %v1380 = vunpack.c.l.b16 %v1168
        %v1381 = vunpack.c.h.b16 %v1168
        %v1382 = vunpack.c.l.b16 %v1169
        %v1383 = vunpack.c.l.b16 %v1170
        %v1384 = vunpack.c.h.b16 %v1170
        %v1385 = vunpack.c.l.b16 %v1171
        %v1386 = vunpack.c.l.b16 %v1172
        %v1387 = vunpack.c.h.b16 %v1172
        %v1388 = vunpack.c.l.b16 %v1173
        %v1389 = vunpack.c.l.b16 %v1174
        %v1390 = vunpack.c.h.b16 %v1174
        %v1391 = vunpack.c.l.b16 %v1175
        %v1392 = vunpack.c.l.b16 %v1176
        %v1393 = vunpack.c.h.b16 %v1176
        %v1394 = vunpack.c.l.b16 %v1177
        %v1395 = vunpack.c.l.b16 %v1178
        %v1396 = vunpack.c.h.b16 %v1178
        %v1397 = vunpack.c.l.b16 %v1179
        %v1398 = vunpack.c.l.b16 %v1180
        %v1399 = vunpack.c.h.b16 %v1180
        %v1400 = vunpack.c.l.b16 %v1181
        %v1401 = vunpack.c.l.b16 %v1182
        %v1402 = vunpack.c.h.b16 %v1182
        %v1403 = vunpack.c.l.b16 %v1183
        %v1404 = vunpack.c.l.b16 %v1184
        %v1405 = vunpack.c.h.b16 %v1184
        %v1406 = vunpack.c.l.b16 %v1185
        %v1407 = vunpack.c.l.b16 %v1186
        %v1408 = vunpack.c.h.b16 %v1186
        %v1409 = vunpack.c.l.b16 %v1187
        %v1410 = vunpack.c.l.b16 %v1188
        %v1411 = vunpack.c.h.b16 %v1188
        %v1412 = vunpack.c.l.b16 %v1189
        %v1413 = vunpack.c.l.b16 %v1190
        %v1414 = vunpack.c.h.b16 %v1190
        %v1415 = vunpack.c.l.b16 %v1191
        %v1416 = vunpack.c.l.b16 %v1192
        %v1417 = vunpack.c.h.b16 %v1192
        %v1418 = vunpack.c.l.b16 %v1193
        %v1419 = vpack.c.b16 %v1326, %v1323
        %v1420 = vpack.c.b16 %v1327, %v1324
        %v1421 = vpack.c.b16 %v1328, %v1325
        %v1422 = vpack.c.b16 %v1332, %v1329
        %v1423 = vpack.c.b16 %v1333, %v1330
        %v1424 = vpack.c.b16 %v1334, %v1331
        %v1425 = vpack.c.b16 %v1338, %v1335
        %v1426 = vpack.c.b16 %v1339, %v1336
        %v1427 = vpack.c.b16 %v1340, %v1337
        %v1428 = vpack.c.b16 %v1344, %v1341
        %v1429 = vpack.c.b16 %v1345, %v1342
        %v1430 = vpack.c.b16 %v1346, %v1343
        %v1431 = vpack.c.b16 %v1350, %v1347
        %v1432 = vpack.c.b16 %v1351, %v1348
        %v1433 = vpack.c.b16 %v1352, %v1349
        %v1434 = vpack.c.b16 %v1356, %v1353
        %v1435 = vpack.c.b16 %v1357, %v1354
        %v1436 = vpack.c.b16 %v1358, %v1355
        %v1437 = vpack.c.b16 %v1362, %v1359
        %v1438 = vpack.c.b16 %v1363, %v1360
        %v1439 = vpack.c.b16 %v1364, %v1361
        %v1440 = vpack.c.b16 %v1368, %v1365
        %v1441 = vpack.c.b16 %v1369, %v1366
        %v1442 = vpack.c.b16 %v1370, %v1367
        %v1443 = vpack.c.b16 %v1374, %v1371
        %v1444 = vpack.c.b16 %v1375, %v1372
        %v1445 = vpack.c.b16 %v1376, %v1373
        %v1446 = vpack.c.b16 %v1380, %v1377
        %v1447 = vpack.c.b16 %v1381, %v1378
        %v1448 = vpack.c.b16 %v1382, %v1379
        %v1449 = vpack.c.b16 %v1386, %v1383
        %v1450 = vpack.c.b16 %v1387, %v1384
        %v1451 = vpack.c.b16 %v1388, %v1385
        %v1452 = vpack.c.b16 %v1392, %v1389
        %v1453 = vpack.c.b16 %v1393, %v1390
        %v1454 = vpack.c.b16 %v1394, %v1391
        %v1455 = vpack.c.b16 %v1398, %v1395
        %v1456 = vpack.c.b16 %v1399, %v1396
        %v1457 = vpack.c.b16 %v1400, %v1397
        %v1458 = vpack.c.b16 %v1404, %v1401
        %v1459 = vpack.c.b16 %v1405, %v1402
        %v1460 = vpack.c.b16 %v1406, %v1403
        %v1461 = vpack.c.b16 %v1410, %v1407
        %v1462 = vpack.c.b16 %v1411, %v1408
        %v1463 = vpack.c.b16 %v1412, %v1409
        %v1464 = vpack.c.b16 %v1416, %v1413
        %v1465 = vpack.c.b16 %v1417, %v1414
        %v1466 = vpack.c.b16 %v1418, %v1415
        %1515 = vmatprep.subr.bf16.mxu0 %v1420
        %1516 = vmatpush1.bf16.msra.mxu0 %v1419
        %1517 = vmatprep.subr.bf16.mxu0 %v1423
        %1518 = vmatpush1.bf16.msra.mxu0 %v1422
        %1519 = vmatprep.subr.bf16.mxu0 %v1426
        %1520 = vmatpush1.bf16.msra.mxu0 %v1425
        %1521 = vmatprep.subr.bf16.mxu0 %v1429
        %1522 = vmatpush1.bf16.msra.mxu0 %v1428
        %1523 = vmatprep.subr.bf16.mxu0 %v1432
        %1524 = vmatpush1.bf16.msra.mxu0 %v1431
        %1525 = vmatprep.subr.bf16.mxu0 %v1435
        %1526 = vmatpush1.bf16.msra.mxu0 %v1434
        %1527 = vmatprep.subr.bf16.mxu0 %v1438
        %1528 = vmatpush1.bf16.msra.mxu0 %v1437
        %1529 = vmatprep.subr.bf16.mxu0 %v1441
        %1530 = vmatpush1.bf16.msra.mxu0 %v1440
        %1531 = vmatprep.subr.bf16.mxu0 %v1444
        %1532 = vmatpush1.bf16.msra.mxu0 %v1443
        %1533 = vmatprep.subr.bf16.mxu0 %v1447
        %1534 = vmatpush1.bf16.msra.mxu0 %v1446
        %1535 = vmatprep.subr.bf16.mxu0 %v1450
        %1536 = vmatpush1.bf16.msra.mxu0 %v1449
        %1537 = vmatprep.subr.bf16.mxu0 %v1453
        %1538 = vmatpush1.bf16.msra.mxu0 %v1452
        %1539 = vmatprep.subr.bf16.mxu0 %v1456
        %1540 = vmatpush1.bf16.msra.mxu0 %v1455
        %1541 = vmatprep.subr.bf16.mxu0 %v1459
        %1542 = vmatpush1.bf16.msra.mxu0 %v1458
        %1543 = vmatprep.subr.bf16.mxu0 %v1462
        %1544 = vmatpush1.bf16.msra.mxu0 %v1461
        %1545 = vmatprep.subr.bf16.mxu0 %v1465
        %1546 = vmatpush1.bf16.msra.mxu0 %v1464
        %1547 = vmatprep.mubr.bf16.mxu0 %v1115
        %1548 = vmatmul.mubr.bf16.gmra.mrb[0].mxu0 %v1114
        %v1549 = vpop.f32.mrb[0].mxu0
        %v1550 = vadd.f32 %v1211, %v1549
        %v1551 = vpop.f32.mrb[0].mxu0
        %v1552 = vadd.f32 %v1212, %v1551
        %v1553 = vpop.f32.mrb[0].mxu0
        %v1554 = vadd.f32 %v1214, %v1553
        %v1555 = vpop.f32.mrb[0].mxu0
        %v1556 = vadd.f32 %v1215, %v1555
        %1557 = vmatprep.mubr.bf16.mxu0 %v1117
        %1558 = vmatmul.mubr.bf16.gmra.mrb[0].mxu0 %v1116
        %v1559 = vpop.f32.mrb[0].mxu0
        %v1560 = vadd.f32 %v1217, %v1559
        %v1561 = vpop.f32.mrb[0].mxu0
        %v1562 = vadd.f32 %v1218, %v1561
        %v1563 = vpop.f32.mrb[0].mxu0
        %v1564 = vadd.f32 %v1220, %v1563
        %v1565 = vpop.f32.mrb[0].mxu0
        %v1566 = vadd.f32 %v1221, %v1565
        %1567 = vmatprep.mubr.bf16.mxu0 %v1119
        %1568 = vmatmul.mubr.bf16.gmra.mrb[0].mxu0 %v1118
        %v1569 = vpop.f32.mrb[0].mxu0
        %v1570 = vadd.f32 %v1223, %v1569
        %v1571 = vpop.f32.mrb[0].mxu0
        %v1572 = vadd.f32 %v1224, %v1571
        %v1573 = vpop.f32.mrb[0].mxu0
        %v1574 = vadd.f32 %v1226, %v1573
        %v1575 = vpop.f32.mrb[0].mxu0
        %v1576 = vadd.f32 %v1227, %v1575
        %1577 = vmatprep.mubr.bf16.mxu0 %v1121
        %1578 = vmatmul.mubr.bf16.gmra.mrb[0].mxu0 %v1120
        %v1579 = vpop.f32.mrb[0].mxu0
        %v1580 = vadd.f32 %v1229, %v1579
        %v1581 = vpop.f32.mrb[0].mxu0
        %v1582 = vadd.f32 %v1230, %v1581
        %v1583 = vpop.f32.mrb[0].mxu0
        %v1584 = vadd.f32 %v1232, %v1583
        %v1585 = vpop.f32.mrb[0].mxu0
        %v1586 = vadd.f32 %v1233, %v1585
        %1587 = vmatprep.mubr.bf16.mxu0 %v1123
        %1588 = vmatmul.mubr.bf16.gmra.mrb[0].mxu0 %v1122
        %v1589 = vpop.f32.mrb[0].mxu0
        %v1590 = vadd.f32 %v1235, %v1589
        %v1591 = vpop.f32.mrb[0].mxu0
        %v1592 = vadd.f32 %v1236, %v1591
        %v1593 = vpop.f32.mrb[0].mxu0
        %v1594 = vadd.f32 %v1238, %v1593
        %v1595 = vpop.f32.mrb[0].mxu0
        %v1596 = vadd.f32 %v1239, %v1595
        %1597 = vmatprep.mubr.bf16.mxu0 %v1125
        %1598 = vmatmul.mubr.bf16.gmra.mrb[0].mxu0 %v1124
        %v1599 = vpop.f32.mrb[0].mxu0
        %v1600 = vadd.f32 %v1241, %v1599
        %v1601 = vpop.f32.mrb[0].mxu0
        %v1602 = vadd.f32 %v1242, %v1601
        %v1603 = vpop.f32.mrb[0].mxu0
        %v1604 = vadd.f32 %v1244, %v1603
        %v1605 = vpop.f32.mrb[0].mxu0
        %v1606 = vadd.f32 %v1245, %v1605
        %1607 = vmatprep.mubr.bf16.mxu0 %v1127
        %1608 = vmatmul.mubr.bf16.gmra.mrb[0].mxu0 %v1126
        %v1609 = vpop.f32.mrb[0].mxu0
        %v1610 = vadd.f32 %v1247, %v1609
        %v1611 = vpop.f32.mrb[0].mxu0
        %v1612 = vadd.f32 %v1248, %v1611
        %v1613 = vpop.f32.mrb[0].mxu0
        %v1614 = vadd.f32 %v1250, %v1613
        %v1615 = vpop.f32.mrb[0].mxu0
        %v1616 = vadd.f32 %v1251, %v1615
        %1617 = vmatprep.mubr.bf16.mxu0 %v1129
        %1618 = vmatmul.mubr.bf16.gmra.mrb[0].mxu0 %v1128
        %v1619 = vpop.f32.mrb[0].mxu0
        %v1620 = vadd.f32 %v1253, %v1619
        %v1621 = vpop.f32.mrb[0].mxu0
        %v1622 = vadd.f32 %v1254, %v1621
        %v1623 = vpop.f32.mrb[0].mxu0
        %v1624 = vadd.f32 %v1256, %v1623
        %v1625 = vpop.f32.mrb[0].mxu0
        %v1626 = vadd.f32 %v1257, %v1625
        %1627 = vdwg.mxu0
        %1628 = vmatprep.subr.bf16.mxu0 0
        %1629 = vmatpush1.bf16.msra.mxu0 %v1421
        %1630 = vmatprep.subr.bf16.mxu0 0
        %1631 = vmatpush1.bf16.msra.mxu0 %v1424
        %1632 = vmatprep.subr.bf16.mxu0 0
        %1633 = vmatpush1.bf16.msra.mxu0 %v1427
        %1634 = vmatprep.subr.bf16.mxu0 0
        %1635 = vmatpush1.bf16.msra.mxu0 %v1430
        %1636 = vmatprep.subr.bf16.mxu0 0
        %1637 = vmatpush1.bf16.msra.mxu0 %v1433
        %1638 = vmatprep.subr.bf16.mxu0 0
        %1639 = vmatpush1.bf16.msra.mxu0 %v1436
        %1640 = vmatprep.subr.bf16.mxu0 0
        %1641 = vmatpush1.bf16.msra.mxu0 %v1439
        %1642 = vmatprep.subr.bf16.mxu0 0
        %1643 = vmatpush1.bf16.msra.mxu0 %v1442
        %1644 = vmatprep.subr.bf16.mxu0 0
        %1645 = vmatpush1.bf16.msra.mxu0 %v1445
        %1646 = vmatprep.subr.bf16.mxu0 0
        %1647 = vmatpush1.bf16.msra.mxu0 %v1448
        %1648 = vmatprep.subr.bf16.mxu0 0
        %1649 = vmatpush1.bf16.msra.mxu0 %v1451
        %1650 = vmatprep.subr.bf16.mxu0 0
        %1651 = vmatpush1.bf16.msra.mxu0 %v1454
        %1652 = vmatprep.subr.bf16.mxu0 0
        %1653 = vmatpush1.bf16.msra.mxu0 %v1457
        %1654 = vmatprep.subr.bf16.mxu0 0
        %1655 = vmatpush1.bf16.msra.mxu0 %v1460
        %1656 = vmatprep.subr.bf16.mxu0 0
        %1657 = vmatpush1.bf16.msra.mxu0 %v1463
        %1658 = vmatprep.subr.bf16.mxu0 0
        %1659 = vmatpush1.bf16.msra.mxu0 %v1466
        %1660 = vmatprep.mubr.bf16.mxu0 %v1115
        %1661 = vmatmul.mubr.bf16.gmra.mrb[0].mxu0 %v1114
        %v1662 = vpop.f32.mrb[0].mxu0
        %v1663 = vadd.f32 %v1213, %v1662
        %v1664 = vpop.f32.mrb[0].mxu0
        %v1665 = vpop.f32.mrb[0].mxu0
        %v1666 = vadd.f32 %v1216, %v1665
        %v1667 = vpop.f32.mrb[0].mxu0
        %1668 = vmatprep.mubr.bf16.mxu0 %v1117
        %1669 = vmatmul.mubr.bf16.gmra.mrb[0].mxu0 %v1116
        %v1670 = vpop.f32.mrb[0].mxu0
        %v1671 = vadd.f32 %v1219, %v1670
        %v1672 = vpop.f32.mrb[0].mxu0
        %v1673 = vpop.f32.mrb[0].mxu0
        %v1674 = vadd.f32 %v1222, %v1673
        %v1675 = vpop.f32.mrb[0].mxu0
        %1676 = vmatprep.mubr.bf16.mxu0 %v1119
        %1677 = vmatmul.mubr.bf16.gmra.mrb[0].mxu0 %v1118
        %v1678 = vpop.f32.mrb[0].mxu0
        %v1679 = vadd.f32 %v1225, %v1678
        %v1680 = vpop.f32.mrb[0].mxu0
        %v1681 = vpop.f32.mrb[0].mxu0
        %v1682 = vadd.f32 %v1228, %v1681
        %v1683 = vpop.f32.mrb[0].mxu0
        %1684 = vmatprep.mubr.bf16.mxu0 %v1121
        %1685 = vmatmul.mubr.bf16.gmra.mrb[0].mxu0 %v1120
        %v1686 = vpop.f32.mrb[0].mxu0
        %v1687 = vadd.f32 %v1231, %v1686
        %v1688 = vpop.f32.mrb[0].mxu0
        %v1689 = vpop.f32.mrb[0].mxu0
        %v1690 = vadd.f32 %v1234, %v1689
        %v1691 = vpop.f32.mrb[0].mxu0
        %1692 = vmatprep.mubr.bf16.mxu0 %v1123
        %1693 = vmatmul.mubr.bf16.gmra.mrb[0].mxu0 %v1122
        %v1694 = vpop.f32.mrb[0].mxu0
        %v1695 = vadd.f32 %v1237, %v1694
        %v1696 = vpop.f32.mrb[0].mxu0
        %v1697 = vpop.f32.mrb[0].mxu0
        %v1698 = vadd.f32 %v1240, %v1697
        %v1699 = vpop.f32.mrb[0].mxu0
        %1700 = vmatprep.mubr.bf16.mxu0 %v1125
        %1701 = vmatmul.mubr.bf16.gmra.mrb[0].mxu0 %v1124
        %v1702 = vpop.f32.mrb[0].mxu0
        %v1703 = vadd.f32 %v1243, %v1702
        %v1704 = vpop.f32.mrb[0].mxu0
        %v1705 = vpop.f32.mrb[0].mxu0
        %v1706 = vadd.f32 %v1246, %v1705
        %v1707 = vpop.f32.mrb[0].mxu0
        %1708 = vmatprep.mubr.bf16.mxu0 %v1127
        %1709 = vmatmul.mubr.bf16.gmra.mrb[0].mxu0 %v1126
        %v1710 = vpop.f32.mrb[0].mxu0
        %v1711 = vadd.f32 %v1249, %v1710
        %v1712 = vpop.f32.mrb[0].mxu0
        %v1713 = vpop.f32.mrb[0].mxu0
        %v1714 = vadd.f32 %v1252, %v1713
        %v1715 = vpop.f32.mrb[0].mxu0
        %1716 = vmatprep.mubr.bf16.mxu0 %v1129
        %1717 = vmatmul.mubr.bf16.gmra.mrb[0].mxu0 %v1128
        %v1718 = vpop.f32.mrb[0].mxu0
        %v1719 = vadd.f32 %v1255, %v1718
        %v1720 = vpop.f32.mrb[0].mxu0
        %v1721 = vpop.f32.mrb[0].mxu0
        %v1722 = vadd.f32 %v1258, %v1721
        %v1723 = vpop.f32.mrb[0].mxu0
        %1724 = vdwg.mxu0
        %v1725 = vld [vmem:[%s6] sm:$0x7]
        %v1727 = vlaneseq
        %v1728 = vshrl.u32 %v1727, 7
        %v1729 = vsub.s32 0, %v1728
        %v1730 = vrot.slane %v1725, %v1729
        %v1731 = vlaneseq
        %v1732 = vshrl.u32 %v1731, 7
        %v1733 = vsub.s32 1, %v1732
        %v1734 = vrot.slane %v1725, %v1733
        %v1735 = vlaneseq
        %v1736 = vshrl.u32 %v1735, 7
        %v1737 = vsub.s32 2, %v1736
        %v1738 = vrot.slane %v1725, %v1737
        %v1742 = vmul.f32 %v1068, %v1730
        %v1743 = vmul.f32 %v1068, %v1734
        %v1744 = vmul.f32 %v1068, %v1738
        %v1745 = vmul.f32 %v1071, %v1730
        %v1746 = vmul.f32 %v1071, %v1734
        %v1747 = vmul.f32 %v1071, %v1738
        %v1748 = vmul.f32 %v1074, %v1730
        %v1749 = vmul.f32 %v1074, %v1734
        %v1750 = vmul.f32 %v1074, %v1738
        %v1751 = vmul.f32 %v1077, %v1730
        %v1752 = vmul.f32 %v1077, %v1734
        %v1753 = vmul.f32 %v1077, %v1738
        %v1754 = vmul.f32 %v1080, %v1730
        %v1755 = vmul.f32 %v1080, %v1734
        %v1756 = vmul.f32 %v1080, %v1738
        %v1757 = vmul.f32 %v1083, %v1730
        %v1758 = vmul.f32 %v1083, %v1734
        %v1759 = vmul.f32 %v1083, %v1738
        %v1760 = vmul.f32 %v1086, %v1730
        %v1761 = vmul.f32 %v1086, %v1734
        %v1762 = vmul.f32 %v1086, %v1738
        %v1763 = vmul.f32 %v1089, %v1730
        %v1764 = vmul.f32 %v1089, %v1734
        %v1765 = vmul.f32 %v1089, %v1738
        %v1766 = vmul.f32 %v1092, %v1730
        %v1767 = vmul.f32 %v1092, %v1734
        %v1768 = vmul.f32 %v1092, %v1738
        %v1769 = vmul.f32 %v1095, %v1730
        %v1770 = vmul.f32 %v1095, %v1734
        %v1771 = vmul.f32 %v1095, %v1738
        %v1772 = vmul.f32 %v1098, %v1730
        %v1773 = vmul.f32 %v1098, %v1734
        %v1774 = vmul.f32 %v1098, %v1738
        %v1775 = vmul.f32 %v1101, %v1730
        %v1776 = vmul.f32 %v1101, %v1734
        %v1777 = vmul.f32 %v1101, %v1738
        %v1778 = vmul.f32 %v1104, %v1730
        %v1779 = vmul.f32 %v1104, %v1734
        %v1780 = vmul.f32 %v1104, %v1738
        %v1781 = vmul.f32 %v1107, %v1730
        %v1782 = vmul.f32 %v1107, %v1734
        %v1783 = vmul.f32 %v1107, %v1738
        %v1784 = vmul.f32 %v1110, %v1730
        %v1785 = vmul.f32 %v1110, %v1734
        %v1786 = vmul.f32 %v1110, %v1738
        %v1787 = vmul.f32 %v1113, %v1730
        %v1788 = vmul.f32 %v1113, %v1734
        %v1789 = vmul.f32 %v1113, %v1738
        %v1790 = vadd.f32 %v1550, %v1742
        %v1791 = vadd.f32 %v1552, %v1743
        %v1792 = vadd.f32 %v1663, %v1744
        %v1793 = vadd.f32 %v1554, %v1745
        %v1794 = vadd.f32 %v1556, %v1746
        %v1795 = vadd.f32 %v1666, %v1747
        %v1796 = vadd.f32 %v1560, %v1748
        %v1797 = vadd.f32 %v1562, %v1749
        %v1798 = vadd.f32 %v1671, %v1750
        %v1799 = vadd.f32 %v1564, %v1751
        %v1800 = vadd.f32 %v1566, %v1752
        %v1801 = vadd.f32 %v1674, %v1753
        %v1802 = vadd.f32 %v1570, %v1754
        %v1803 = vadd.f32 %v1572, %v1755
        %v1804 = vadd.f32 %v1679, %v1756
        %v1805 = vadd.f32 %v1574, %v1757
        %v1806 = vadd.f32 %v1576, %v1758
        %v1807 = vadd.f32 %v1682, %v1759
        %v1808 = vadd.f32 %v1580, %v1760
        %v1809 = vadd.f32 %v1582, %v1761
        %v1810 = vadd.f32 %v1687, %v1762
        %v1811 = vadd.f32 %v1584, %v1763
        %v1812 = vadd.f32 %v1586, %v1764
        %v1813 = vadd.f32 %v1690, %v1765
        %v1814 = vadd.f32 %v1590, %v1766
        %v1815 = vadd.f32 %v1592, %v1767
        %v1816 = vadd.f32 %v1695, %v1768
        %v1817 = vadd.f32 %v1594, %v1769
        %v1818 = vadd.f32 %v1596, %v1770
        %v1819 = vadd.f32 %v1698, %v1771
        %v1820 = vadd.f32 %v1600, %v1772
        %v1821 = vadd.f32 %v1602, %v1773
        %v1822 = vadd.f32 %v1703, %v1774
        %v1823 = vadd.f32 %v1604, %v1775
        %v1824 = vadd.f32 %v1606, %v1776
        %v1825 = vadd.f32 %v1706, %v1777
        %v1826 = vadd.f32 %v1610, %v1778
        %v1827 = vadd.f32 %v1612, %v1779
        %v1828 = vadd.f32 %v1711, %v1780
        %v1829 = vadd.f32 %v1614, %v1781
        %v1830 = vadd.f32 %v1616, %v1782
        %v1831 = vadd.f32 %v1714, %v1783
        %v1832 = vadd.f32 %v1620, %v1784
        %v1833 = vadd.f32 %v1622, %v1785
        %v1834 = vadd.f32 %v1719, %v1786
        %v1835 = vadd.f32 %v1624, %v1787
        %v1836 = vadd.f32 %v1626, %v1788
        %v1837 = vadd.f32 %v1722, %v1789
        %v1838 = vld [vmem:[%s7] sm:$0x7]
        %v1840 = vlaneseq
        %v1841 = vshrl.u32 %v1840, 7
        %v1842 = vsub.s32 0, %v1841
        %v1843 = vrot.slane %v1838, %v1842
        %v1844 = vlaneseq
        %v1845 = vshrl.u32 %v1844, 7
        %v1846 = vsub.s32 1, %v1845
        %v1847 = vrot.slane %v1838, %v1846
        %v1848 = vlaneseq
        %v1849 = vshrl.u32 %v1848, 7
        %v1850 = vsub.s32 2, %v1849
        %v1851 = vrot.slane %v1838, %v1850
        %v1855 = vadd.f32 %v1790, %v1843
        %v1856 = vadd.f32 %v1791, %v1847
        %v1857 = vadd.f32 %v1792, %v1851
        %v1858 = vadd.f32 %v1793, %v1843
        %v1859 = vadd.f32 %v1794, %v1847
        %v1860 = vadd.f32 %v1795, %v1851
        %v1861 = vadd.f32 %v1796, %v1843
        %v1862 = vadd.f32 %v1797, %v1847
        %v1863 = vadd.f32 %v1798, %v1851
        %v1864 = vadd.f32 %v1799, %v1843
        %v1865 = vadd.f32 %v1800, %v1847
        %v1866 = vadd.f32 %v1801, %v1851
        %v1867 = vadd.f32 %v1802, %v1843
        %v1868 = vadd.f32 %v1803, %v1847
        %v1869 = vadd.f32 %v1804, %v1851
        %v1870 = vadd.f32 %v1805, %v1843
        %v1871 = vadd.f32 %v1806, %v1847
        %v1872 = vadd.f32 %v1807, %v1851
        %v1873 = vadd.f32 %v1808, %v1843
        %v1874 = vadd.f32 %v1809, %v1847
        %v1875 = vadd.f32 %v1810, %v1851
        %v1876 = vadd.f32 %v1811, %v1843
        %v1877 = vadd.f32 %v1812, %v1847
        %v1878 = vadd.f32 %v1813, %v1851
        %v1879 = vadd.f32 %v1814, %v1843
        %v1880 = vadd.f32 %v1815, %v1847
        %v1881 = vadd.f32 %v1816, %v1851
        %v1882 = vadd.f32 %v1817, %v1843
        %v1883 = vadd.f32 %v1818, %v1847
        %v1884 = vadd.f32 %v1819, %v1851
        %v1885 = vadd.f32 %v1820, %v1843
        %v1886 = vadd.f32 %v1821, %v1847
        %v1887 = vadd.f32 %v1822, %v1851
        %v1888 = vadd.f32 %v1823, %v1843
        %v1889 = vadd.f32 %v1824, %v1847
        %v1890 = vadd.f32 %v1825, %v1851
        %v1891 = vadd.f32 %v1826, %v1843
        %v1892 = vadd.f32 %v1827, %v1847
        %v1893 = vadd.f32 %v1828, %v1851
        %v1894 = vadd.f32 %v1829, %v1843
        %v1895 = vadd.f32 %v1830, %v1847
        %v1896 = vadd.f32 %v1831, %v1851
        %v1897 = vadd.f32 %v1832, %v1843
        %v1898 = vadd.f32 %v1833, %v1847
        %v1899 = vadd.f32 %v1834, %v1851
        %v1900 = vadd.f32 %v1835, %v1843
        %v1901 = vadd.f32 %v1836, %v1847
        %v1902 = vadd.f32 %v1837, %v1851
        %s1903 = smul.u32 %s30, 128
        %s1904 = sshra.s32 %s1903, 3
        %s1905 = sand.u32 %s1903, 7
        %s1906 = smul.addr %s1904, 4
        %s1907 = scalar_lea.vmem [#allocation7], %s1906
        %v1908 = vld [vmem:[%s1907] sm:$0xf]
        %v1909 = vld [vmem:[%s1907 + $0x4] sm:$0xf]
        %v1910 = vld [vmem:[%s1907 + $0x8] sm:$0xf]
        %v1911 = vld [vmem:[%s1907 + $0xc] sm:$0xf]
        %v1912 = vld [vmem:[%s1907 + $0x10] sm:$0xf]
        %v1913 = vld [vmem:[%s1907 + $0x14] sm:$0xf]
        %v1914 = vld [vmem:[%s1907 + $0x18] sm:$0xf]
        %v1915 = vld [vmem:[%s1907 + $0x1c] sm:$0xf]
        %v1916 = vld [vmem:[%s1907 + $0x20] sm:$0xf]
        %v1917 = vld [vmem:[%s1907 + $0x24] sm:$0xf]
        %v1918 = vld [vmem:[%s1907 + $0x28] sm:$0xf]
        %v1919 = vld [vmem:[%s1907 + $0x2c] sm:$0xf]
        %v1920 = vld [vmem:[%s1907 + $0x30] sm:$0xf]
        %v1921 = vld [vmem:[%s1907 + $0x34] sm:$0xf]
        %v1922 = vld [vmem:[%s1907 + $0x38] sm:$0xf]
        %v1923 = vld [vmem:[%s1907 + $0x3c] sm:$0xf]
        %v1924 = vld [vmem:[#allocation10] sm:$0xff]
        %v1925 = vld [vmem:[#allocation10 + $0x8] sm:$0xf]
        %v1926 = vld [vmem:[#allocation10 + $0xc] sm:$0xff]
        %v1927 = vld [vmem:[#allocation10 + $0x14] sm:$0xf]
        %v1928 = vld [vmem:[#allocation10 + $0x18] sm:$0xff]
        %v1929 = vld [vmem:[#allocation10 + $0x20] sm:$0xf]
        %v1930 = vld [vmem:[#allocation10 + $0x24] sm:$0xff]
        %v1931 = vld [vmem:[#allocation10 + $0x2c] sm:$0xf]
        %v1932 = vld [vmem:[#allocation10 + $0x30] sm:$0xff]
        %v1933 = vld [vmem:[#allocation10 + $0x38] sm:$0xf]
        %v1934 = vld [vmem:[#allocation10 + $0x3c] sm:$0xff]
        %v1935 = vld [vmem:[#allocation10 + $0x44] sm:$0xf]
        %v1936 = vld [vmem:[#allocation10 + $0x48] sm:$0xff]
        %v1937 = vld [vmem:[#allocation10 + $0x50] sm:$0xf]
        %v1938 = vld [vmem:[#allocation10 + $0x54] sm:$0xff]
        %v1939 = vld [vmem:[#allocation10 + $0x5c] sm:$0xf]
        %v1940 = vld [vmem:[#allocation10 + $0x60] sm:$0xff]
        %v1941 = vld [vmem:[#allocation10 + $0x68] sm:$0xf]
        %v1942 = vld [vmem:[#allocation10 + $0x6c] sm:$0xff]
        %v1943 = vld [vmem:[#allocation10 + $0x74] sm:$0xf]
        %v1944 = vld [vmem:[#allocation10 + $0x78] sm:$0xff]
        %v1945 = vld [vmem:[#allocation10 + $0x80] sm:$0xf]
        %v1946 = vld [vmem:[#allocation10 + $0x84] sm:$0xff]
        %v1947 = vld [vmem:[#allocation10 + $0x8c] sm:$0xf]
        %v1948 = vld [vmem:[#allocation10 + $0x90] sm:$0xff]
        %v1949 = vld [vmem:[#allocation10 + $0x98] sm:$0xf]
        %v1950 = vld [vmem:[#allocation10 + $0x9c] sm:$0xff]
        %v1951 = vld [vmem:[#allocation10 + $0xa4] sm:$0xf]
        %v1952 = vld [vmem:[#allocation10 + $0xa8] sm:$0xff]
        %v1953 = vld [vmem:[#allocation10 + $0xb0] sm:$0xf]
        %v1954 = vld [vmem:[#allocation10 + $0xb4] sm:$0xff]
        %v1955 = vld [vmem:[#allocation10 + $0xbc] sm:$0xf]
        %v1972 = vunpack.c.l.b16 %v1908
        %v1973 = vunpack.c.l.b16 %v1909
        %v1974 = vunpack.c.l.b16 %v1910
        %v1975 = vunpack.c.l.b16 %v1911
        %v1976 = vunpack.c.l.b16 %v1912
        %v1977 = vunpack.c.l.b16 %v1913
        %v1978 = vunpack.c.l.b16 %v1914
        %v1979 = vunpack.c.l.b16 %v1915
        %v1980 = vunpack.c.l.b16 %v1916
        %v1981 = vunpack.c.l.b16 %v1917
        %v1982 = vunpack.c.l.b16 %v1918
        %v1983 = vunpack.c.l.b16 %v1919
        %v1984 = vunpack.c.l.b16 %v1920
        %v1985 = vunpack.c.l.b16 %v1921
        %v1986 = vunpack.c.l.b16 %v1922
        %v1987 = vunpack.c.l.b16 %v1923
        %v1988 = vpack.c.b16 %v1973, %v1972
        %v1989 = vpack.c.b16 %v1975, %v1974
        %v1990 = vpack.c.b16 %v1977, %v1976
        %v1991 = vpack.c.b16 %v1979, %v1978
        %v1992 = vpack.c.b16 %v1981, %v1980
        %v1993 = vpack.c.b16 %v1983, %v1982
        %v1994 = vpack.c.b16 %v1985, %v1984
        %v1995 = vpack.c.b16 %v1987, %v1986
        %v2036 = vunpack.c.l.b16 %v1924
        %v2037 = vunpack.c.h.b16 %v1924
        %v2038 = vunpack.c.l.b16 %v1925
        %v2039 = vunpack.c.l.b16 %v1926
        %v2040 = vunpack.c.h.b16 %v1926
        %v2041 = vunpack.c.l.b16 %v1927
        %v2042 = vunpack.c.l.b16 %v1928
        %v2043 = vunpack.c.h.b16 %v1928
        %v2044 = vunpack.c.l.b16 %v1929
        %v2045 = vunpack.c.l.b16 %v1930
        %v2046 = vunpack.c.h.b16 %v1930
        %v2047 = vunpack.c.l.b16 %v1931
        %v2048 = vunpack.c.l.b16 %v1932
        %v2049 = vunpack.c.h.b16 %v1932
        %v2050 = vunpack.c.l.b16 %v1933
        %v2051 = vunpack.c.l.b16 %v1934
        %v2052 = vunpack.c.h.b16 %v1934
        %v2053 = vunpack.c.l.b16 %v1935
        %v2054 = vunpack.c.l.b16 %v1936
        %v2055 = vunpack.c.h.b16 %v1936
        %v2056 = vunpack.c.l.b16 %v1937
        %v2057 = vunpack.c.l.b16 %v1938
        %v2058 = vunpack.c.h.b16 %v1938
        %v2059 = vunpack.c.l.b16 %v1939
        %v2060 = vunpack.c.l.b16 %v1940
        %v2061 = vunpack.c.h.b16 %v1940
        %v2062 = vunpack.c.l.b16 %v1941
        %v2063 = vunpack.c.l.b16 %v1942
        %v2064 = vunpack.c.h.b16 %v1942
        %v2065 = vunpack.c.l.b16 %v1943
        %v2066 = vunpack.c.l.b16 %v1944
        %v2067 = vunpack.c.h.b16 %v1944
        %v2068 = vunpack.c.l.b16 %v1945
        %v2069 = vunpack.c.l.b16 %v1946
        %v2070 = vunpack.c.h.b16 %v1946
        %v2071 = vunpack.c.l.b16 %v1947
        %v2072 = vunpack.c.l.b16 %v1948
        %v2073 = vunpack.c.h.b16 %v1948
        %v2074 = vunpack.c.l.b16 %v1949
        %v2075 = vunpack.c.l.b16 %v1950
        %v2076 = vunpack.c.h.b16 %v1950
        %v2077 = vunpack.c.l.b16 %v1951
        %v2078 = vunpack.c.l.b16 %v1952
        %v2079 = vunpack.c.h.b16 %v1952
        %v2080 = vunpack.c.l.b16 %v1953
        %v2081 = vunpack.c.l.b16 %v1954
        %v2082 = vunpack.c.h.b16 %v1954
        %v2083 = vunpack.c.l.b16 %v1955
        %v2084 = vpack.c.b16 %v2039, %v2036
        %v2085 = vpack.c.b16 %v2040, %v2037
        %v2086 = vpack.c.b16 %v2041, %v2038
        %v2087 = vpack.c.b16 %v2045, %v2042
        %v2088 = vpack.c.b16 %v2046, %v2043
        %v2089 = vpack.c.b16 %v2047, %v2044
        %v2090 = vpack.c.b16 %v2051, %v2048
        %v2091 = vpack.c.b16 %v2052, %v2049
        %v2092 = vpack.c.b16 %v2053, %v2050
        %v2093 = vpack.c.b16 %v2057, %v2054
        %v2094 = vpack.c.b16 %v2058, %v2055
        %v2095 = vpack.c.b16 %v2059, %v2056
        %v2096 = vpack.c.b16 %v2063, %v2060
        %v2097 = vpack.c.b16 %v2064, %v2061
        %v2098 = vpack.c.b16 %v2065, %v2062
        %v2099 = vpack.c.b16 %v2069, %v2066
        %v2100 = vpack.c.b16 %v2070, %v2067
        %v2101 = vpack.c.b16 %v2071, %v2068
        %v2102 = vpack.c.b16 %v2075, %v2072
        %v2103 = vpack.c.b16 %v2076, %v2073
        %v2104 = vpack.c.b16 %v2077, %v2074
        %v2105 = vpack.c.b16 %v2081, %v2078
        %v2106 = vpack.c.b16 %v2082, %v2079
        %v2107 = vpack.c.b16 %v2083, %v2080
        %2132 = vmatprep.subr.bf16.mxu0 %v2085
        %2133 = vmatpush1.bf16.msra.mxu0 %v2084
        %2134 = vmatprep.subr.bf16.mxu0 %v2088
        %2135 = vmatpush1.bf16.msra.mxu0 %v2087
        %2136 = vmatprep.subr.bf16.mxu0 %v2091
        %2137 = vmatpush1.bf16.msra.mxu0 %v2090
        %2138 = vmatprep.subr.bf16.mxu0 %v2094
        %2139 = vmatpush1.bf16.msra.mxu0 %v2093
        %2140 = vmatprep.subr.bf16.mxu0 %v2097
        %2141 = vmatpush1.bf16.msra.mxu0 %v2096
        %2142 = vmatprep.subr.bf16.mxu0 %v2100
        %2143 = vmatpush1.bf16.msra.mxu0 %v2099
        %2144 = vmatprep.subr.bf16.mxu0 %v2103
        %2145 = vmatpush1.bf16.msra.mxu0 %v2102
        %2146 = vmatprep.subr.bf16.mxu0 %v2106
        %2147 = vmatpush1.bf16.msra.mxu0 %v2105
        %2148 = vmatprep.subr.bf16.mxu0 0
        %2149 = vmatpush1.bf16.msra.mxu0 0
        %2150 = vmatprep.subr.bf16.mxu0 0
        %2151 = vmatpush1.bf16.msra.mxu0 0
        %2152 = vmatprep.subr.bf16.mxu0 0
        %2153 = vmatpush1.bf16.msra.mxu0 0
        %2154 = vmatprep.subr.bf16.mxu0 0
        %2155 = vmatpush1.bf16.msra.mxu0 0
        %2156 = vmatprep.subr.bf16.mxu0 0
        %2157 = vmatpush1.bf16.msra.mxu0 0
        %2158 = vmatprep.subr.bf16.mxu0 0
        %2159 = vmatpush1.bf16.msra.mxu0 0
        %2160 = vmatprep.subr.bf16.mxu0 0
        %2161 = vmatpush1.bf16.msra.mxu0 0
        %2162 = vmatprep.subr.bf16.mxu0 0
        %2163 = vmatpush1.bf16.msra.mxu0 0
        %2164 = vmatprep.mubr.bf16.mxu0 0
        %2165 = vmatmul.mubr.bf16.gmra.mrb[0].mxu0 %v1988
        %v2166 = vpop.f32.mrb[0].mxu0
        %v2167 = vadd.f32 0.0, %v2166
        %v2168 = vpop.f32.mrb[0].mxu0
        %v2169 = vadd.f32 0.0, %v2168
        %v2170 = vpop.f32.mrb[0].mxu0
        %v2171 = vadd.f32 0.0, %v2170
        %v2172 = vpop.f32.mrb[0].mxu0
        %v2173 = vadd.f32 0.0, %v2172
        %2174 = vmatprep.mubr.bf16.mxu0 0
        %2175 = vmatmul.mubr.bf16.gmra.mrb[0].mxu0 %v1989
        %v2176 = vpop.f32.mrb[0].mxu0
        %v2177 = vadd.f32 0.0, %v2176
        %v2178 = vpop.f32.mrb[0].mxu0
        %v2179 = vadd.f32 0.0, %v2178
        %v2180 = vpop.f32.mrb[0].mxu0
        %v2181 = vadd.f32 0.0, %v2180
        %v2182 = vpop.f32.mrb[0].mxu0
        %v2183 = vadd.f32 0.0, %v2182
        %2184 = vmatprep.mubr.bf16.mxu0 0
        %2185 = vmatmul.mubr.bf16.gmra.mrb[0].mxu0 %v1990
        %v2186 = vpop.f32.mrb[0].mxu0
        %v2187 = vadd.f32 0.0, %v2186
        %v2188 = vpop.f32.mrb[0].mxu0
        %v2189 = vadd.f32 0.0, %v2188
        %v2190 = vpop.f32.mrb[0].mxu0
        %v2191 = vadd.f32 0.0, %v2190
        %v2192 = vpop.f32.mrb[0].mxu0
        %v2193 = vadd.f32 0.0, %v2192
        %2194 = vmatprep.mubr.bf16.mxu0 0
        %2195 = vmatmul.mubr.bf16.gmra.mrb[0].mxu0 %v1991
        %v2196 = vpop.f32.mrb[0].mxu0
        %v2197 = vadd.f32 0.0, %v2196
        %v2198 = vpop.f32.mrb[0].mxu0
        %v2199 = vadd.f32 0.0, %v2198
        %v2200 = vpop.f32.mrb[0].mxu0
        %v2201 = vadd.f32 0.0, %v2200
        %v2202 = vpop.f32.mrb[0].mxu0
        %v2203 = vadd.f32 0.0, %v2202
        %2204 = vmatprep.mubr.bf16.mxu0 0
        %2205 = vmatmul.mubr.bf16.gmra.mrb[0].mxu0 %v1992
        %v2206 = vpop.f32.mrb[0].mxu0
        %v2207 = vadd.f32 0.0, %v2206
        %v2208 = vpop.f32.mrb[0].mxu0
        %v2209 = vadd.f32 0.0, %v2208
        %v2210 = vpop.f32.mrb[0].mxu0
        %v2211 = vadd.f32 0.0, %v2210
        %v2212 = vpop.f32.mrb[0].mxu0
        %v2213 = vadd.f32 0.0, %v2212
        %2214 = vmatprep.mubr.bf16.mxu0 0
        %2215 = vmatmul.mubr.bf16.gmra.mrb[0].mxu0 %v1993
        %v2216 = vpop.f32.mrb[0].mxu0
        %v2217 = vadd.f32 0.0, %v2216
        %v2218 = vpop.f32.mrb[0].mxu0
        %v2219 = vadd.f32 0.0, %v2218
        %v2220 = vpop.f32.mrb[0].mxu0
        %v2221 = vadd.f32 0.0, %v2220
        %v2222 = vpop.f32.mrb[0].mxu0
        %v2223 = vadd.f32 0.0, %v2222
        %2224 = vmatprep.mubr.bf16.mxu0 0
        %2225 = vmatmul.mubr.bf16.gmra.mrb[0].mxu0 %v1994
        %v2226 = vpop.f32.mrb[0].mxu0
        %v2227 = vadd.f32 0.0, %v2226
        %v2228 = vpop.f32.mrb[0].mxu0
        %v2229 = vadd.f32 0.0, %v2228
        %v2230 = vpop.f32.mrb[0].mxu0
        %v2231 = vadd.f32 0.0, %v2230
        %v2232 = vpop.f32.mrb[0].mxu0
        %v2233 = vadd.f32 0.0, %v2232
        %2234 = vmatprep.mubr.bf16.mxu0 0
        %2235 = vmatmul.mubr.bf16.gmra.mrb[0].mxu0 %v1995
        %v2236 = vpop.f32.mrb[0].mxu0
        %v2237 = vadd.f32 0.0, %v2236
        %v2238 = vpop.f32.mrb[0].mxu0
        %v2239 = vadd.f32 0.0, %v2238
        %v2240 = vpop.f32.mrb[0].mxu0
        %v2241 = vadd.f32 0.0, %v2240
        %v2242 = vpop.f32.mrb[0].mxu0
        %v2243 = vadd.f32 0.0, %v2242
        %2244 = vdwg.mxu0
        %2245 = vmatprep.subr.bf16.mxu0 0
        %2246 = vmatpush1.bf16.msra.mxu0 %v2086
        %2247 = vmatprep.subr.bf16.mxu0 0
        %2248 = vmatpush1.bf16.msra.mxu0 %v2089
        %2249 = vmatprep.subr.bf16.mxu0 0
        %2250 = vmatpush1.bf16.msra.mxu0 %v2092
        %2251 = vmatprep.subr.bf16.mxu0 0
        %2252 = vmatpush1.bf16.msra.mxu0 %v2095
        %2253 = vmatprep.subr.bf16.mxu0 0
        %2254 = vmatpush1.bf16.msra.mxu0 %v2098
        %2255 = vmatprep.subr.bf16.mxu0 0
        %2256 = vmatpush1.bf16.msra.mxu0 %v2101
        %2257 = vmatprep.subr.bf16.mxu0 0
        %2258 = vmatpush1.bf16.msra.mxu0 %v2104
        %2259 = vmatprep.subr.bf16.mxu0 0
        %2260 = vmatpush1.bf16.msra.mxu0 %v2107
        %2261 = vmatprep.subr.bf16.mxu0 0
        %2262 = vmatpush1.bf16.msra.mxu0 0
        %2263 = vmatprep.subr.bf16.mxu0 0
        %2264 = vmatpush1.bf16.msra.mxu0 0
        %2265 = vmatprep.subr.bf16.mxu0 0
        %2266 = vmatpush1.bf16.msra.mxu0 0
        %2267 = vmatprep.subr.bf16.mxu0 0
        %2268 = vmatpush1.bf16.msra.mxu0 0
        %2269 = vmatprep.subr.bf16.mxu0 0
        %2270 = vmatpush1.bf16.msra.mxu0 0
        %2271 = vmatprep.subr.bf16.mxu0 0
        %2272 = vmatpush1.bf16.msra.mxu0 0
        %2273 = vmatprep.subr.bf16.mxu0 0
        %2274 = vmatpush1.bf16.msra.mxu0 0
        %2275 = vmatprep.subr.bf16.mxu0 0
        %2276 = vmatpush1.bf16.msra.mxu0 0
        %2277 = vmatprep.mubr.bf16.mxu0 0
        %2278 = vmatmul.mubr.bf16.gmra.mrb[0].mxu0 %v1988
        %v2279 = vpop.f32.mrb[0].mxu0
        %v2280 = vadd.f32 0.0, %v2279
        %v2281 = vpop.f32.mrb[0].mxu0
        %v2282 = vpop.f32.mrb[0].mxu0
        %v2283 = vadd.f32 0.0, %v2282
        %v2284 = vpop.f32.mrb[0].mxu0
        %2285 = vmatprep.mubr.bf16.mxu0 0
        %2286 = vmatmul.mubr.bf16.gmra.mrb[0].mxu0 %v1989
        %v2287 = vpop.f32.mrb[0].mxu0
        %v2288 = vadd.f32 0.0, %v2287
        %v2289 = vpop.f32.mrb[0].mxu0
        %v2290 = vpop.f32.mrb[0].mxu0
        %v2291 = vadd.f32 0.0, %v2290
        %v2292 = vpop.f32.mrb[0].mxu0
        %2293 = vmatprep.mubr.bf16.mxu0 0
        %2294 = vmatmul.mubr.bf16.gmra.mrb[0].mxu0 %v1990
        %v2295 = vpop.f32.mrb[0].mxu0
        %v2296 = vadd.f32 0.0, %v2295
        %v2297 = vpop.f32.mrb[0].mxu0
        %v2298 = vpop.f32.mrb[0].mxu0
        %v2299 = vadd.f32 0.0, %v2298
        %v2300 = vpop.f32.mrb[0].mxu0
        %2301 = vmatprep.mubr.bf16.mxu0 0
        %2302 = vmatmul.mubr.bf16.gmra.mrb[0].mxu0 %v1991
        %v2303 = vpop.f32.mrb[0].mxu0
        %v2304 = vadd.f32 0.0, %v2303
        %v2305 = vpop.f32.mrb[0].mxu0
        %v2306 = vpop.f32.mrb[0].mxu0
        %v2307 = vadd.f32 0.0, %v2306
        %v2308 = vpop.f32.mrb[0].mxu0
        %2309 = vmatprep.mubr.bf16.mxu0 0
        %2310 = vmatmul.mubr.bf16.gmra.mrb[0].mxu0 %v1992
        %v2311 = vpop.f32.mrb[0].mxu0
        %v2312 = vadd.f32 0.0, %v2311
        %v2313 = vpop.f32.mrb[0].mxu0
        %v2314 = vpop.f32.mrb[0].mxu0
        %v2315 = vadd.f32 0.0, %v2314
        %v2316 = vpop.f32.mrb[0].mxu0
        %2317 = vmatprep.mubr.bf16.mxu0 0
        %2318 = vmatmul.mubr.bf16.gmra.mrb[0].mxu0 %v1993
        %v2319 = vpop.f32.mrb[0].mxu0
        %v2320 = vadd.f32 0.0, %v2319
        %v2321 = vpop.f32.mrb[0].mxu0
        %v2322 = vpop.f32.mrb[0].mxu0
        %v2323 = vadd.f32 0.0, %v2322
        %v2324 = vpop.f32.mrb[0].mxu0
        %2325 = vmatprep.mubr.bf16.mxu0 0
        %2326 = vmatmul.mubr.bf16.gmra.mrb[0].mxu0 %v1994
        %v2327 = vpop.f32.mrb[0].mxu0
        %v2328 = vadd.f32 0.0, %v2327
        %v2329 = vpop.f32.mrb[0].mxu0
        %v2330 = vpop.f32.mrb[0].mxu0
        %v2331 = vadd.f32 0.0, %v2330
        %v2332 = vpop.f32.mrb[0].mxu0
        %2333 = vmatprep.mubr.bf16.mxu0 0
        %2334 = vmatmul.mubr.bf16.gmra.mrb[0].mxu0 %v1995
        %v2335 = vpop.f32.mrb[0].mxu0
        %v2336 = vadd.f32 0.0, %v2335
        %v2337 = vpop.f32.mrb[0].mxu0
        %v2338 = vpop.f32.mrb[0].mxu0
        %v2339 = vadd.f32 0.0, %v2338
        %v2340 = vpop.f32.mrb[0].mxu0
        %2341 = vdwg.mxu0
        %v2342 = vunpack.c.l.bf16 %v1908
        %v2343 = vunpack.c.l.bf16 %v1909
        %v2344 = vunpack.c.l.bf16 %v1910
        %v2345 = vunpack.c.l.bf16 %v1911
        %v2346 = vunpack.c.l.bf16 %v1912
        %v2347 = vunpack.c.l.bf16 %v1913
        %v2348 = vunpack.c.l.bf16 %v1914
        %v2349 = vunpack.c.l.bf16 %v1915
        %v2350 = vunpack.c.l.bf16 %v1916
        %v2351 = vunpack.c.l.bf16 %v1917
        %v2352 = vunpack.c.l.bf16 %v1918
        %v2353 = vunpack.c.l.bf16 %v1919
        %v2354 = vunpack.c.l.bf16 %v1920
        %v2355 = vunpack.c.l.bf16 %v1921
        %v2356 = vunpack.c.l.bf16 %v1922
        %v2357 = vunpack.c.l.bf16 %v1923
        %v2358 = vld [vmem:[%s8] sm:$0x1]
        %v2360 = vlaneseq
        %v2361 = vshrl.u32 %v2360, 7
        %v2362 = vsub.s32 0, %v2361
        %v2363 = vrot.slane %v2358, %v2362
        %v2365 = vadd.f32 %v2280, %v2363
        %v2366 = vadd.f32 %v2283, %v2363
        %v2367 = vadd.f32 %v2288, %v2363
        %v2368 = vadd.f32 %v2291, %v2363
        %v2369 = vadd.f32 %v2296, %v2363
        %v2370 = vadd.f32 %v2299, %v2363
        %v2371 = vadd.f32 %v2304, %v2363
        %v2372 = vadd.f32 %v2307, %v2363
        %v2373 = vadd.f32 %v2312, %v2363
        %v2374 = vadd.f32 %v2315, %v2363
        %v2375 = vadd.f32 %v2320, %v2363
        %v2376 = vadd.f32 %v2323, %v2363
        %v2377 = vadd.f32 %v2328, %v2363
        %v2378 = vadd.f32 %v2331, %v2363
        %v2379 = vadd.f32 %v2336, %v2363
        %v2380 = vadd.f32 %v2339, %v2363
        %v2381 = vadd.f32 %v1855, %v2167
        %v2382 = vadd.f32 %v1858, %v2171
        %v2383 = vadd.f32 %v1861, %v2177
        %v2384 = vadd.f32 %v1864, %v2181
        %v2385 = vadd.f32 %v1867, %v2187
        %v2386 = vadd.f32 %v1870, %v2191
        %v2387 = vadd.f32 %v1873, %v2197
        %v2388 = vadd.f32 %v1876, %v2201
        %v2389 = vadd.f32 %v1879, %v2207
        %v2390 = vadd.f32 %v1882, %v2211
        %v2391 = vadd.f32 %v1885, %v2217
        %v2392 = vadd.f32 %v1888, %v2221
        %v2393 = vadd.f32 %v1891, %v2227
        %v2394 = vadd.f32 %v1894, %v2231
        %v2395 = vadd.f32 %v1897, %v2237
        %v2396 = vadd.f32 %v1900, %v2241
        %v2397 = vxor.u32 %v2381, 2147483648
        %v2398 = vxor.u32 %v2382, 2147483648
        %v2399 = vxor.u32 %v2383, 2147483648
        %v2400 = vxor.u32 %v2384, 2147483648
        %v2401 = vxor.u32 %v2385, 2147483648
        %v2402 = vxor.u32 %v2386, 2147483648
        %v2403 = vxor.u32 %v2387, 2147483648
        %v2404 = vxor.u32 %v2388, 2147483648
        %v2405 = vxor.u32 %v2389, 2147483648
        %v2406 = vxor.u32 %v2390, 2147483648
        %v2407 = vxor.u32 %v2391, 2147483648
        %v2408 = vxor.u32 %v2392, 2147483648
        %v2409 = vxor.u32 %v2393, 2147483648
        %v2410 = vxor.u32 %v2394, 2147483648
        %v2411 = vxor.u32 %v2395, 2147483648
        %v2412 = vxor.u32 %v2396, 2147483648
        %v2413 = vmul.f32 %v2397, 1.442695
        %v2414 = vpow.pop %v2413
        %v2415 = vmul.f32 %v2398, 1.442695
        %v2416 = vpow.pop %v2415
        %v2417 = vmul.f32 %v2399, 1.442695
        %v2418 = vpow.pop %v2417
        %v2419 = vmul.f32 %v2400, 1.442695
        %v2420 = vpow.pop %v2419
        %v2421 = vmul.f32 %v2401, 1.442695
        %v2422 = vpow.pop %v2421
        %v2423 = vmul.f32 %v2402, 1.442695
        %v2424 = vpow.pop %v2423
        %v2425 = vmul.f32 %v2403, 1.442695
        %v2426 = vpow.pop %v2425
        %v2427 = vmul.f32 %v2404, 1.442695
        %v2428 = vpow.pop %v2427
        %v2429 = vmul.f32 %v2405, 1.442695
        %v2430 = vpow.pop %v2429
        %v2431 = vmul.f32 %v2406, 1.442695
        %v2432 = vpow.pop %v2431
        %v2433 = vmul.f32 %v2407, 1.442695
        %v2434 = vpow.pop %v2433
        %v2435 = vmul.f32 %v2408, 1.442695
        %v2436 = vpow.pop %v2435
        %v2437 = vmul.f32 %v2409, 1.442695
        %v2438 = vpow.pop %v2437
        %v2439 = vmul.f32 %v2410, 1.442695
        %v2440 = vpow.pop %v2439
        %v2441 = vmul.f32 %v2411, 1.442695
        %v2442 = vpow.pop %v2441
        %v2443 = vmul.f32 %v2412, 1.442695
        %v2444 = vpow.pop %v2443
        %v2445 = vadd.f32 %v2414, 1.0
        %v2446 = vadd.f32 %v2416, 1.0
        %v2447 = vadd.f32 %v2418, 1.0
        %v2448 = vadd.f32 %v2420, 1.0
        %v2449 = vadd.f32 %v2422, 1.0
        %v2450 = vadd.f32 %v2424, 1.0
        %v2451 = vadd.f32 %v2426, 1.0
        %v2452 = vadd.f32 %v2428, 1.0
        %v2453 = vadd.f32 %v2430, 1.0
        %v2454 = vadd.f32 %v2432, 1.0
        %v2455 = vadd.f32 %v2434, 1.0
        %v2456 = vadd.f32 %v2436, 1.0
        %v2457 = vadd.f32 %v2438, 1.0
        %v2458 = vadd.f32 %v2440, 1.0
        %v2459 = vadd.f32 %v2442, 1.0
        %v2460 = vadd.f32 %v2444, 1.0
        %v2461 = vrcp.pop %v2445
        %v2462 = vmul.f32 1.0, %v2461
        %v2463 = vrcp.pop %v2446
        %v2464 = vmul.f32 1.0, %v2463
        %v2465 = vrcp.pop %v2447
        %v2466 = vmul.f32 1.0, %v2465
        %v2467 = vrcp.pop %v2448
        %v2468 = vmul.f32 1.0, %v2467
        %v2469 = vrcp.pop %v2449
        %v2470 = vmul.f32 1.0, %v2469
        %v2471 = vrcp.pop %v2450
        %v2472 = vmul.f32 1.0, %v2471
        %v2473 = vrcp.pop %v2451
        %v2474 = vmul.f32 1.0, %v2473
        %v2475 = vrcp.pop %v2452
        %v2476 = vmul.f32 1.0, %v2475
        %v2477 = vrcp.pop %v2453
        %v2478 = vmul.f32 1.0, %v2477
        %v2479 = vrcp.pop %v2454
        %v2480 = vmul.f32 1.0, %v2479
        %v2481 = vrcp.pop %v2455
        %v2482 = vmul.f32 1.0, %v2481
        %v2483 = vrcp.pop %v2456
        %v2484 = vmul.f32 1.0, %v2483
        %v2485 = vrcp.pop %v2457
        %v2486 = vmul.f32 1.0, %v2485
        %v2487 = vrcp.pop %v2458
        %v2488 = vmul.f32 1.0, %v2487
        %v2489 = vrcp.pop %v2459
        %v2490 = vmul.f32 1.0, %v2489
        %v2491 = vrcp.pop %v2460
        %v2492 = vmul.f32 1.0, %v2491
        %v2493 = vadd.f32 %v1856, %v2169
        %v2494 = vadd.f32 %v1859, %v2173
        %v2495 = vadd.f32 %v1862, %v2179
        %v2496 = vadd.f32 %v1865, %v2183
        %v2497 = vadd.f32 %v1868, %v2189
        %v2498 = vadd.f32 %v1871, %v2193
        %v2499 = vadd.f32 %v1874, %v2199
        %v2500 = vadd.f32 %v1877, %v2203
        %v2501 = vadd.f32 %v1880, %v2209
        %v2502 = vadd.f32 %v1883, %v2213
        %v2503 = vadd.f32 %v1886, %v2219
        %v2504 = vadd.f32 %v1889, %v2223
        %v2505 = vadd.f32 %v1892, %v2229
        %v2506 = vadd.f32 %v1895, %v2233
        %v2507 = vadd.f32 %v1898, %v2239
        %v2508 = vadd.f32 %v1901, %v2243
        %v2509 = vxor.u32 %v2493, 2147483648
        %v2510 = vxor.u32 %v2494, 2147483648
        %v2511 = vxor.u32 %v2495, 2147483648
        %v2512 = vxor.u32 %v2496, 2147483648
        %v2513 = vxor.u32 %v2497, 2147483648
        %v2514 = vxor.u32 %v2498, 2147483648
        %v2515 = vxor.u32 %v2499, 2147483648
        %v2516 = vxor.u32 %v2500, 2147483648
        %v2517 = vxor.u32 %v2501, 2147483648
        %v2518 = vxor.u32 %v2502, 2147483648
        %v2519 = vxor.u32 %v2503, 2147483648
        %v2520 = vxor.u32 %v2504, 2147483648
        %v2521 = vxor.u32 %v2505, 2147483648
        %v2522 = vxor.u32 %v2506, 2147483648
        %v2523 = vxor.u32 %v2507, 2147483648
        %v2524 = vxor.u32 %v2508, 2147483648
        %v2525 = vmul.f32 %v2509, 1.442695
        %v2526 = vpow.pop %v2525
        %v2527 = vmul.f32 %v2510, 1.442695
        %v2528 = vpow.pop %v2527
        %v2529 = vmul.f32 %v2511, 1.442695
        %v2530 = vpow.pop %v2529
        %v2531 = vmul.f32 %v2512, 1.442695
        %v2532 = vpow.pop %v2531
        %v2533 = vmul.f32 %v2513, 1.442695
        %v2534 = vpow.pop %v2533
        %v2535 = vmul.f32 %v2514, 1.442695
        %v2536 = vpow.pop %v2535
        %v2537 = vmul.f32 %v2515, 1.442695
        %v2538 = vpow.pop %v2537
        %v2539 = vmul.f32 %v2516, 1.442695
        %v2540 = vpow.pop %v2539
        %v2541 = vmul.f32 %v2517, 1.442695
        %v2542 = vpow.pop %v2541
        %v2543 = vmul.f32 %v2518, 1.442695
        %v2544 = vpow.pop %v2543
        %v2545 = vmul.f32 %v2519, 1.442695
        %v2546 = vpow.pop %v2545
        %v2547 = vmul.f32 %v2520, 1.442695
        %v2548 = vpow.pop %v2547
        %v2549 = vmul.f32 %v2521, 1.442695
        %v2550 = vpow.pop %v2549
        %v2551 = vmul.f32 %v2522, 1.442695
        %v2552 = vpow.pop %v2551
        %v2553 = vmul.f32 %v2523, 1.442695
        %v2554 = vpow.pop %v2553
        %v2555 = vmul.f32 %v2524, 1.442695
        %v2556 = vpow.pop %v2555
        %v2557 = vadd.f32 %v2526, 1.0
        %v2558 = vadd.f32 %v2528, 1.0
        %v2559 = vadd.f32 %v2530, 1.0
        %v2560 = vadd.f32 %v2532, 1.0
        %v2561 = vadd.f32 %v2534, 1.0
        %v2562 = vadd.f32 %v2536, 1.0
        %v2563 = vadd.f32 %v2538, 1.0
        %v2564 = vadd.f32 %v2540, 1.0
        %v2565 = vadd.f32 %v2542, 1.0
        %v2566 = vadd.f32 %v2544, 1.0
        %v2567 = vadd.f32 %v2546, 1.0
        %v2568 = vadd.f32 %v2548, 1.0
        %v2569 = vadd.f32 %v2550, 1.0
        %v2570 = vadd.f32 %v2552, 1.0
        %v2571 = vadd.f32 %v2554, 1.0
        %v2572 = vadd.f32 %v2556, 1.0
        %v2573 = vrcp.pop %v2557
        %v2574 = vmul.f32 1.0, %v2573
        %v2575 = vrcp.pop %v2558
        %v2576 = vmul.f32 1.0, %v2575
        %v2577 = vrcp.pop %v2559
        %v2578 = vmul.f32 1.0, %v2577
        %v2579 = vrcp.pop %v2560
        %v2580 = vmul.f32 1.0, %v2579
        %v2581 = vrcp.pop %v2561
        %v2582 = vmul.f32 1.0, %v2581
        %v2583 = vrcp.pop %v2562
        %v2584 = vmul.f32 1.0, %v2583
        %v2585 = vrcp.pop %v2563
        %v2586 = vmul.f32 1.0, %v2585
        %v2587 = vrcp.pop %v2564
        %v2588 = vmul.f32 1.0, %v2587
        %v2589 = vrcp.pop %v2565
        %v2590 = vmul.f32 1.0, %v2589
        %v2591 = vrcp.pop %v2566
        %v2592 = vmul.f32 1.0, %v2591
        %v2593 = vrcp.pop %v2567
        %v2594 = vmul.f32 1.0, %v2593
        %v2595 = vrcp.pop %v2568
        %v2596 = vmul.f32 1.0, %v2595
        %v2597 = vrcp.pop %v2569
        %v2598 = vmul.f32 1.0, %v2597
        %v2599 = vrcp.pop %v2570
        %v2600 = vmul.f32 1.0, %v2599
        %v2601 = vrcp.pop %v2571
        %v2602 = vmul.f32 1.0, %v2601
        %v2603 = vrcp.pop %v2572
        %v2604 = vmul.f32 1.0, %v2603
        %v2605 = vmul.f32 %v2462, %v2365
        %v2606 = vmul.f32 %v2464, %v2366
        %v2607 = vmul.f32 %v2466, %v2367
        %v2608 = vmul.f32 %v2468, %v2368
        %v2609 = vmul.f32 %v2470, %v2369
        %v2610 = vmul.f32 %v2472, %v2370
        %v2611 = vmul.f32 %v2474, %v2371
        %v2612 = vmul.f32 %v2476, %v2372
        %v2613 = vmul.f32 %v2478, %v2373
        %v2614 = vmul.f32 %v2480, %v2374
        %v2615 = vmul.f32 %v2482, %v2375
        %v2616 = vmul.f32 %v2484, %v2376
        %v2617 = vmul.f32 %v2486, %v2377
        %v2618 = vmul.f32 %v2488, %v2378
        %v2619 = vmul.f32 %v2490, %v2379
        %v2620 = vmul.f32 %v2492, %v2380
        %v2621 = vadd.f32 %v1857, %v2605
        %v2622 = vadd.f32 %v1860, %v2606
        %v2623 = vadd.f32 %v1863, %v2607
        %v2624 = vadd.f32 %v1866, %v2608
        %v2625 = vadd.f32 %v1869, %v2609
        %v2626 = vadd.f32 %v1872, %v2610
        %v2627 = vadd.f32 %v1875, %v2611
        %v2628 = vadd.f32 %v1878, %v2612
        %v2629 = vadd.f32 %v1881, %v2613
        %v2630 = vadd.f32 %v1884, %v2614
        %v2631 = vadd.f32 %v1887, %v2615
        %v2632 = vadd.f32 %v1890, %v2616
        %v2633 = vadd.f32 %v1893, %v2617
        %v2634 = vadd.f32 %v1896, %v2618
        %v2635 = vadd.f32 %v1899, %v2619
        %v2636 = vadd.f32 %v1902, %v2620
        %v2637 = vtanh.pop %v2621
        %v2638 = vtanh.pop %v2622
        %v2639 = vtanh.pop %v2623
        %v2640 = vtanh.pop %v2624
        %v2641 = vtanh.pop %v2625
        %v2642 = vtanh.pop %v2626
        %v2643 = vtanh.pop %v2627
        %v2644 = vtanh.pop %v2628
        %v2645 = vtanh.pop %v2629
        %v2646 = vtanh.pop %v2630
        %v2647 = vtanh.pop %v2631
        %v2648 = vtanh.pop %v2632
        %v2649 = vtanh.pop %v2633
        %v2650 = vtanh.pop %v2634
        %v2651 = vtanh.pop %v2635
        %v2652 = vtanh.pop %v2636
        %v2653 = vsub.f32 1.0, %v2574
        %v2654 = vsub.f32 1.0, %v2576
        %v2655 = vsub.f32 1.0, %v2578
        %v2656 = vsub.f32 1.0, %v2580
        %v2657 = vsub.f32 1.0, %v2582
        %v2658 = vsub.f32 1.0, %v2584
        %v2659 = vsub.f32 1.0, %v2586
        %v2660 = vsub.f32 1.0, %v2588
        %v2661 = vsub.f32 1.0, %v2590
        %v2662 = vsub.f32 1.0, %v2592
        %v2663 = vsub.f32 1.0, %v2594
        %v2664 = vsub.f32 1.0, %v2596
        %v2665 = vsub.f32 1.0, %v2598
        %v2666 = vsub.f32 1.0, %v2600
        %v2667 = vsub.f32 1.0, %v2602
        %v2668 = vsub.f32 1.0, %v2604
        %v2669 = vmul.f32 %v2653, %v2342
        %v2670 = vmul.f32 %v2654, %v2343
        %v2671 = vmul.f32 %v2655, %v2344
        %v2672 = vmul.f32 %v2656, %v2345
        %v2673 = vmul.f32 %v2657, %v2346
        %v2674 = vmul.f32 %v2658, %v2347
        %v2675 = vmul.f32 %v2659, %v2348
        %v2676 = vmul.f32 %v2660, %v2349
        %v2677 = vmul.f32 %v2661, %v2350
        %v2678 = vmul.f32 %v2662, %v2351
        %v2679 = vmul.f32 %v2663, %v2352
        %v2680 = vmul.f32 %v2664, %v2353
        %v2681 = vmul.f32 %v2665, %v2354
        %v2682 = vmul.f32 %v2666, %v2355
        %v2683 = vmul.f32 %v2667, %v2356
        %v2684 = vmul.f32 %v2668, %v2357
        %v2685 = vmul.f32 %v2574, %v2637
        %v2686 = vmul.f32 %v2576, %v2638
        %v2687 = vmul.f32 %v2578, %v2639
        %v2688 = vmul.f32 %v2580, %v2640
        %v2689 = vmul.f32 %v2582, %v2641
        %v2690 = vmul.f32 %v2584, %v2642
        %v2691 = vmul.f32 %v2586, %v2643
        %v2692 = vmul.f32 %v2588, %v2644
        %v2693 = vmul.f32 %v2590, %v2645
        %v2694 = vmul.f32 %v2592, %v2646
        %v2695 = vmul.f32 %v2594, %v2647
        %v2696 = vmul.f32 %v2596, %v2648
        %v2697 = vmul.f32 %v2598, %v2649
        %v2698 = vmul.f32 %v2600, %v2650
        %v2699 = vmul.f32 %v2602, %v2651
        %v2700 = vmul.f32 %v2604, %v2652
        %v2701 = vadd.f32 %v2669, %v2685
        %v2702 = vadd.f32 %v2670, %v2686
        %v2703 = vadd.f32 %v2671, %v2687
        %v2704 = vadd.f32 %v2672, %v2688
        %v2705 = vadd.f32 %v2673, %v2689
        %v2706 = vadd.f32 %v2674, %v2690
        %v2707 = vadd.f32 %v2675, %v2691
        %v2708 = vadd.f32 %v2676, %v2692
        %v2709 = vadd.f32 %v2677, %v2693
        %v2710 = vadd.f32 %v2678, %v2694
        %v2711 = vadd.f32 %v2679, %v2695
        %v2712 = vadd.f32 %v2680, %v2696
        %v2713 = vadd.f32 %v2681, %v2697
        %v2714 = vadd.f32 %v2682, %v2698
        %v2715 = vadd.f32 %v2683, %v2699
        %v2716 = vadd.f32 %v2684, %v2700
        %2717 = vst [vmem:[%s435] sm:$0xff] %v2701
        %2718 = vst [vmem:[%s435 + $0x8] sm:$0xff] %v2702
        %2719 = vst [vmem:[%s435 + $0x10] sm:$0xff] %v2703
        %2720 = vst [vmem:[%s435 + $0x18] sm:$0xff] %v2704
        %2721 = vst [vmem:[%s435 + $0x20] sm:$0xff] %v2705
        %2722 = vst [vmem:[%s435 + $0x28] sm:$0xff] %v2706
        %2723 = vst [vmem:[%s435 + $0x30] sm:$0xff] %v2707
        %2724 = vst [vmem:[%s435 + $0x38] sm:$0xff] %v2708
        %2725 = vst [vmem:[%s435 + $0x40] sm:$0xff] %v2709
        %2726 = vst [vmem:[%s435 + $0x48] sm:$0xff] %v2710
        %2727 = vst [vmem:[%s435 + $0x50] sm:$0xff] %v2711
        %2728 = vst [vmem:[%s435 + $0x58] sm:$0xff] %v2712
        %2729 = vst [vmem:[%s435 + $0x60] sm:$0xff] %v2713
        %2730 = vst [vmem:[%s435 + $0x68] sm:$0xff] %v2714
        %2731 = vst [vmem:[%s435 + $0x70] sm:$0xff] %v2715
        %2732 = vst [vmem:[%s435 + $0x78] sm:$0xff] %v2716
        %s2733 = sand.u32 %s237, 1
        %s2734 = scalar_lea.sflag [#allocation4], %s2733
        %s2735 = sand.u32 %s237, 1
        %s2736 = smul.addr %s2735, 128
        %s2737 = scalar_lea.vmem [#allocation11], %s2736
        // Predicated region
        $region77: #{tpu_custom_call.1} parent=55 // pred_check
          %p2738 = pneg %p247
        $region78: #{tpu_custom_call.1} parent=55 // pred_check_branch
          %2740 = sbr.rel (%p2738) target = $region80
        $region79: #{tpu_custom_call.1} parent=55 // pred_region
          %s2741 = smul.u32 16, %s30
          %s2743 = ssub.s32 2048, 2048
          %2744 = vsyncadd %s2734, %s2743
          %s2745 = smul.addr %s2741, 128
          %s2746 = scalar_lea.hbm %s9, %s2745
          %s2747 = sshll.u32 %s2737, 4
          %s2748 = int_to_ptr.vmem [resolvable:$true] %s2747
          %2753 = dma.vmem_to_hbm [thread:$0]  %s2748, 2048, %s2746, %s2734, 128, 128, 8
        $region80: #{tpu_custom_call.1} parent=55 // pred_fallthru
          _
      $region56: #{tpu_custom_call.1} parent=5 // pred_fallthru
        _
      %p2754 = scmp.le.s32.totalorder 2, %s25
      // Predicated region
      $region81: #{tpu_custom_call.1} parent=5 // pred_check
        %p2755 = pneg %p2754
      $region82: #{tpu_custom_call.1} parent=5 // pred_check_branch
        %2757 = sbr.rel (%p2755) target = $region84
      $region83: #{tpu_custom_call.1} parent=5 // pred_region
        %s2758 = ssub.s32 %s25, 2
        // Predicated region
        $region85: #{tpu_custom_call.1} parent=83 // pred_check
          %p2759 = pneg %p253
        $region86: #{tpu_custom_call.1} parent=83 // pred_check_branch
          %2761 = sbr.rel (%p2759) target = $region88
        $region87: #{tpu_custom_call.1} parent=83 // pred_region
          %s2762 = sand.u32 %s238, 1
          %s2763 = scalar_lea.sflag [#allocation4], %s2762
          %s2764 = sand.u32 %s238, 1
          %s2765 = smul.addr %s2764, 128
          %s2766 = scalar_lea.vmem [#allocation11], %s2765
          %2767 = dma.done %s2763, 2048
        $region88: #{tpu_custom_call.1} parent=83 // pred_fallthru
          _
      $region84: #{tpu_custom_call.1} parent=5 // pred_fallthru
        _
    $region6: #{tpu_custom_call.1} parent=1 // loop_footer
      %s29 = sadd.s32 1, %s25
    $region7: #{tpu_custom_call.1} parent=1 // loop_footer_branch
      %24 = sbr.rel target = $region3
    $region8: #{tpu_custom_call.1} parent=1 // loop_exit
      _
    %2768 = vsyncpa [#allocation3], 1
    %s2769 = scalar_lea.sflag [#allocation3], 1
    %2770 = vsyncpa %s2769, 1
    %2771 = vsyncpa [#allocation6], 1
    %s2772 = scalar_lea.sflag [#allocation6], 1
    %2773 = vsyncpa %s2772, 1
    %2774 = vsyncpa [#allocation9], 1
    %2775 = vsyncpa [#allocation4], 1
    %s2776 = scalar_lea.sflag [#allocation4], 1
    %2777 = vsyncpa %s2776, 1

</llo_original>
